<compile_context>
chip_gen: v5e
topology: v5e:2x2
jax: 0.10.0
libtpu: 0.0.40
codegen_flags: <defaults>
</compile_context>

<pallas_src>
import typing

import jax
import jax.numpy as jnp
from jax import lax
from jax.experimental import pallas as pl
from jax.experimental.pallas import tpu as pltpu


# Conservative across v5e/v6e/v7x (v5e default scoped VMEM is 16 MiB,
# v7x physical VMEM is 64 MiB per TC).
_DENSE_VMEM_BUDGET_BYTES = 8 * 1024 * 1024


# --------------------------------------------------------------------------- #
# Dense path: whole raster in VMEM, scatter via in-VMEM dynamic stores.
# --------------------------------------------------------------------------- #
def _dense_scatter_kernel(idx_ref, fg_ref, raster_ref, out_ref):
    # Copy the resident raster block once, then overwrite the scattered rows.
    out_ref[...] = raster_ref[...]

    def body(n, carry):
        out_ref[pl.ds(idx_ref[n], 1)] = fg_ref[pl.ds(n, 1)]
        return carry

    lax.fori_loop(0, fg_ref.shape[0], body, 0)


# --------------------------------------------------------------------------- #
# Sparse path: one foreground row per grid step, data-dependent output block.
# --------------------------------------------------------------------------- #
def _sparse_scatter_kernel(idx_ref, fg_ref, raster_hbm_ref, out_ref):
    # idx_ref is consumed by the out_spec index_map; raster_hbm_ref is the raw
    # aliased HBM buffer (never DMA'd, never read -- aliasing alone keeps the
    # unvisited rows intact).
    del idx_ref, raster_hbm_ref
    out_ref[...] = fg_ref[pl.ds(pl.program_id(0), 1)]


# --------------------------------------------------------------------------- #
# Wrapper: flatten indices, dispatch dense vs sparse scatter.
# --------------------------------------------------------------------------- #
def foreground_remap_pallas(raster: jnp.ndarray,
                            foreground: jnp.ndarray,
                            indices: typing.Dict[str, jnp.ndarray],
                            *,
                            force_sparse: bool = False) -> jnp.ndarray:
    """Functional equivalent of `raster[tuple(indices.values())] = foreground`."""
    idx_list = [jnp.reshape(jnp.asarray(v), (-1,)).astype(jnp.int32)
                for v in indices.values()]
    n_idx = len(idx_list)
    assert 0 < n_idx <= raster.ndim, "indices must address leading raster dims"

    lead_shape = raster.shape[:n_idx]
    tail_shape = raster.shape[n_idx:]
    N = int(idx_list[0].shape[0])
    M = 1
    for d in lead_shape:
        M *= int(d)
    C = 1
    for d in tail_shape:
        C *= int(d)
    if N == 0:
        return raster

    # Row-major flat index over the indexed leading dims; lands in SMEM as a
    # flat 1-D int32 table via scalar prefetch.
    flat_idx = jnp.zeros((N,), jnp.int32)
    stride = 1
    for dim, ia in zip(reversed(lead_shape), reversed(idx_list)):
        ia = jnp.where(ia < 0, ia + dim, ia)          # PyTorch negative wrap
        flat_idx = flat_idx + ia * jnp.int32(stride)
        stride *= int(dim)
    # TODO(synk): PyTorch raises on out-of-range indices; we clamp instead.
    flat_idx = jnp.clip(flat_idx, 0, M - 1)

    # Free, layout-preserving views; the singleton axis keeps every block's
    # last two dims equal to the full array dims (layout-legal on TPU).
    raster_flat = jnp.reshape(raster, (M, 1, C))
    if foreground.shape == (N,) + tail_shape and foreground.dtype == raster.dtype:
        fg = foreground                        # skip pointless HBM round trip
    else:
        fg = jnp.broadcast_to(foreground.astype(raster.dtype), (N,) + tail_shape)
    fg_flat = jnp.reshape(fg, (N, 1, C))

    itemsize = raster.dtype.itemsize
    dense_vmem_bytes = (2 * M + N) * C * itemsize
    use_dense = (not force_sparse) and dense_vmem_bytes <= _DENSE_VMEM_BUDGET_BYTES

    if use_dense:
        out_flat = pl.pallas_call(
            _dense_scatter_kernel,
            grid_spec=pltpu.PrefetchScalarGridSpec(
                num_scalar_prefetch=1,
                grid=(1,),
                in_specs=[
                    pl.BlockSpec((N, 1, C), lambda i, idx_ref: (0, 0, 0)),
                    pl.BlockSpec((M, 1, C), lambda i, idx_ref: (0, 0, 0)),
                ],
                out_specs=pl.BlockSpec((M, 1, C), lambda i, idx_ref: (0, 0, 0)),
            ),
            out_shape=jax.ShapeDtypeStruct((M, 1, C), raster.dtype),
            # args: (flat_idx, fg_flat, raster_flat) -> raster is operand 2.
            input_output_aliases={2: 0},
            compiler_params=pltpu.CompilerParams(
                dimension_semantics=("arbitrary",)),
        )(flat_idx, fg_flat, raster_flat)
    else:
        fg_bytes = N * C * itemsize
        vmem_limit = None
        if fg_bytes > 12 * 1024 * 1024:
            # Resident foreground outgrows the default scoped VMEM; raise the
            # limit (capped for v7x's 64 MiB physical VMEM).
            vmem_limit = min(int(fg_bytes * 2) + (1 << 20), 48 * 1024 * 1024)
        out_flat = pl.pallas_call(
            _sparse_scatter_kernel,
            grid_spec=pltpu.PrefetchScalarGridSpec(
                num_scalar_prefetch=1,
                grid=(N,),
                in_specs=[
                    # whole foreground resident in VMEM (constant block index
                    # -> loaded once, not re-DMA'd per step)
                    pl.BlockSpec((N, 1, C), lambda i, idx_ref: (0, 0, 0)),
                    # aliased raster stays a raw HBM ref: no per-step DMA
                    pl.BlockSpec(memory_space=pl.ANY),
                ],
                out_specs=pl.BlockSpec((1, 1, C),
                                       lambda i, idx_ref: (idx_ref[i], 0, 0)),
            ),
            out_shape=jax.ShapeDtypeStruct((M, 1, C), raster.dtype),
            input_output_aliases={2: 0},
            compiler_params=pltpu.CompilerParams(
                # duplicate indices may collide -> sequential grid keeps
                # last-write-wins deterministic.
                dimension_semantics=("arbitrary",),
                vmem_limit_bytes=vmem_limit),
        )(flat_idx, fg_flat, raster_flat)

    return jnp.reshape(out_flat, raster.shape)


# --------------------------------------------------------------------------- #
# Module mirroring moai's ForegroundRemap forward.
# --------------------------------------------------------------------------- #
class ForegroundRemap:
    def __init__(self) -> None:
        pass

    def __call__(self,
                 raster: jnp.ndarray,
                 foreground: jnp.ndarray,
                 indices: typing.Dict[str, jnp.ndarray]) -> jnp.ndarray:
        return foreground_remap_pallas(raster, foreground, indices)


if __name__ == "__main__":
    key = jax.random.PRNGKey(0)
    B, H, W, C = 2, 16, 16, 4      # raster: [B, H, W, C]
    N = 8                          # number of foreground pixels to remap

    k1, k2, k3 = jax.random.split(key, 3)
    raster = jax.random.normal(k1, (B, H, W, C), dtype=jnp.float32)
    foreground = jax.random.normal(k2, (N, C), dtype=jnp.float32)

    # Deterministic, unique pixel positions (PyTorch duplicate-index assignment
    # order is unspecified anyway).
    flat = jax.random.permutation(k3, B * H * W)[:N]
    b_idx = (flat // (H * W)).astype(jnp.int32)
    r_idx = ((flat // W) % H).astype(jnp.int32)
    c_idx = (flat % W).astype(jnp.int32)
    indices = {"batch": b_idx, "row": r_idx, "col": c_idx}

    # Reference: functional advanced-index scatter.
    expected = raster.at[(b_idx, r_idx, c_idx)].set(foreground)

    module = ForegroundRemap()

    # Dense (raster-in-VMEM) fast path -- default dispatch at this size.
    out_dense = jax.block_until_ready(module(raster, foreground, indices))
    assert out_dense.shape == raster.shape
    assert bool(jnp.allclose(out_dense, expected)), "dense path mismatch"

    # Sparse per-row scatter path (exercised explicitly for coverage).
    out_sparse = jax.block_until_ready(
        foreground_remap_pallas(raster, foreground, indices, force_sparse=True))
    assert bool(jnp.allclose(out_sparse, expected)), "sparse path mismatch"

    print("KERNEL_OK")
</pallas_src>

<mosaic_0001>
module attributes {stable_mosaic.version = 11 : i64} {
  func.func @_dense_scatter_kernel(%arg0: i32, %arg1: memref<8xi32, #tpu.memory_space<smem>>, %arg2: memref<8x1x4xf32, #tpu.memory_space<vmem>>, %arg3: memref<512x1x4xf32, #tpu.memory_space<vmem>>, %arg4: memref<512x1x4xf32, #tpu.memory_space<vmem>>) attributes {dimension_semantics = [#tpu.dimension_semantics<arbitrary>], iteration_bounds = array<i64: 1>, scalar_prefetch = 1 : i64, scratch_operands = 0 : i64, tpu.core_type = #tpu.core_type<tc>, window_params = [{pipeline_mode = #tpu.pipeline_mode<synchronous>, transform_indices = @transform_0, window_bounds = array<i64: 8, 1, 4>}, {pipeline_mode = #tpu.pipeline_mode<synchronous>, transform_indices = @transform_1, window_bounds = array<i64: 512, 1, 4>}, {pipeline_mode = #tpu.pipeline_mode<synchronous>, transform_indices = @transform_2, window_bounds = array<i64: 512, 1, 4>}]} {
    %c0 = arith.constant 0 : index
    %c0_0 = arith.constant 0 : index
    %c0_1 = arith.constant 0 : index
    %0 = vector.load %arg3[%c0, %c0_0, %c0_1] : memref<512x1x4xf32, #tpu.memory_space<vmem>>, vector<512x1x4xf32>
    %c0_2 = arith.constant 0 : index
    %c0_3 = arith.constant 0 : index
    %c0_4 = arith.constant 0 : index
    %1 = vector.load %arg4[%c0_2, %c0_3, %c0_4] : memref<512x1x4xf32, #tpu.memory_space<vmem>>, vector<512x1x4xf32>
    tpu.vector_store %arg4[%c0_2, %c0_3, %c0_4], %0 {strides = array<i32>} : memref<512x1x4xf32, #tpu.memory_space<vmem>>, vector<512x1x4xf32>,
    %c0_i32 = arith.constant 0 : i32
    %c8_i32 = arith.constant 8 : i32
    %2 = arith.addi %c0_i32, %c8_i32 : i32
    %c1_i32 = arith.constant 1 : i32
    scf.for %arg5 = %c0_i32 to %2 step %c1_i32  : i32 {
      %3 = arith.index_cast %arg5 : i32 to index
      %c0_6 = arith.constant 0 : index
      %c0_7 = arith.constant 0 : index
      %4 = vector.load %arg2[%3, %c0_6, %c0_7] : memref<8x1x4xf32, #tpu.memory_space<vmem>>, vector<1x1x4xf32>
      %5 = arith.index_cast %arg5 : i32 to index
      %6 = memref.load %arg1[%5] : memref<8xi32, #tpu.memory_space<smem>>
      %7 = arith.index_cast %6 : i32 to index
      %c0_8 = arith.constant 0 : index
      %c0_9 = arith.constant 0 : index
      %8 = vector.load %arg4[%7, %c0_8, %c0_9] : memref<512x1x4xf32, #tpu.memory_space<vmem>>, vector<1x1x4xf32>
      tpu.vector_store %arg4[%7, %c0_8, %c0_9], %4 {strides = array<i32>} : memref<512x1x4xf32, #tpu.memory_space<vmem>>, vector<1x1x4xf32>,
    }
    %c8_i32_5 = arith.constant 8 : i32
    return
  }
  func.func @transform_0(%arg0: i32, %arg1: memref<8xi32, #tpu.memory_space<smem>>) -> (i32, i32, i32) {
    %c0_i32 = arith.constant 0 : i32
    %c0_i32_0 = arith.constant 0 : i32
    %c0_i32_1 = arith.constant 0 : i32
    %c0_i32_2 = arith.constant 0 : i32
    return %c0_i32, %c0_i32_0, %c0_i32_1 : i32, i32, i32
  }
  func.func @transform_1(%arg0: i32, %arg1: memref<8xi32, #tpu.memory_space<smem>>) -> (i32, i32, i32) {
    %c0_i32 = arith.constant 0 : i32
    %c0_i32_0 = arith.constant 0 : i32
    %c0_i32_1 = arith.constant 0 : i32
    %c0_i32_2 = arith.constant 0 : i32
    return %c0_i32, %c0_i32_0, %c0_i32_1 : i32, i32, i32
  }
  func.func @transform_2(%arg0: i32, %arg1: memref<8xi32, #tpu.memory_space<smem>>) -> (i32, i32, i32) {
    %c0_i32 = arith.constant 0 : i32
    %c0_i32_0 = arith.constant 0 : i32
    %c0_i32_1 = arith.constant 0 : i32
    %c0_i32_2 = arith.constant 0 : i32
    return %c0_i32, %c0_i32_0, %c0_i32_1 : i32, i32, i32
  }
}

</mosaic_0001>

<llo_original>
// kernel: tpu_custom_call.1
$region0: #{tpu_custom_call.1}
  #allocation0 [shape = 'u32[]', space=smem, size = 0x4, offset = 0x4, fixed_abs, tag = 'smem constant byte address 0x4 - core index']
  #allocation1 [shape = 'u32[72,128]{1,0:T(1,128)}', space=vmem, size = 0x9000, scoped, tag = 'internal scratch']
  #allocation2 [shape = 's32[1]{0}', space=sflag, size = 0x4, scoped, tag = 'scoped memory for tpu_custom_call.1']
  #allocation3 [shape = 'u8[512]{0}', space=smem, size = 0x200, scoped, tag = 'prefetched SMEM operand 0']
  %s0 = inlined_call_operand.vmem [shape: s32[8], index: 0, kind: input, shape index: {}]
  %s1 = inlined_call_operand.vmem [shape: f32[8,1,4], index: 1, kind: input, shape index: {}]
  %s2 = inlined_call_operand.vmem [shape: f32[512,1,4], index: 2, kind: input, shape index: {}, may-alias: {2,3}]
  %s3 = inlined_call_operand.vmem [shape: f32[512,1,4], index: 3, kind: output, shape index: {}, may-alias: {2,3}]
  %s4 = sld [smem:[#allocation0]]
  $region25: #{tpu_custom_call.1} parent=0
    _
  %s6 = ssub.s32 1, %s4
  %s7 = scalar_select 0, %s6, %s4
  %s9 = sshll.u32 %s0, 4
  %s10 = int_to_ptr.vmem [resolvable:$true] %s9
  %12 = dma.vmem_to_smem %s10, 16, [#allocation3], [#allocation2]
  %14 = dma.done [#allocation2], 16
  %15 = sfence
  // Predicated region
  $region2: #{tpu_custom_call.1} parent=0 // pred_check
    _
  $region3: #{tpu_custom_call.1} parent=0 // pred_check_branch
    %17 = sbr.rel (0) target = $region5
  $region4: #{tpu_custom_call.1} parent=0 // pred_region
    _
  $region5: #{tpu_custom_call.1} parent=0 // pred_fallthru
    _
  // Predicated region
  $region6: #{tpu_custom_call.1} parent=0 // pred_check
    _
  $region7: #{tpu_custom_call.1} parent=0 // pred_check_branch
    %19 = sbr.rel (0) target = $region9
  $region8: #{tpu_custom_call.1} parent=0 // pred_region
    _
  $region9: #{tpu_custom_call.1} parent=0 // pred_fallthru
    _
  %v20 = vld [vmem:[%s2] sm:$0x1]
  %v21 = vld [vmem:[%s2 + $0x1] sm:$0x1]
  %v22 = vld [vmem:[%s2 + $0x2] sm:$0x1]
  %v23 = vld [vmem:[%s2 + $0x3] sm:$0x1]
  %v24 = vld [vmem:[%s2 + $0x4] sm:$0x1]
  %v25 = vld [vmem:[%s2 + $0x5] sm:$0x1]
  %v26 = vld [vmem:[%s2 + $0x6] sm:$0x1]
  %v27 = vld [vmem:[%s2 + $0x7] sm:$0x1]
  %v28 = vld [vmem:[%s2 + $0x8] sm:$0x1]
  %v29 = vld [vmem:[%s2 + $0x9] sm:$0x1]
  %v30 = vld [vmem:[%s2 + $0xa] sm:$0x1]
  %v31 = vld [vmem:[%s2 + $0xb] sm:$0x1]
  %v32 = vld [vmem:[%s2 + $0xc] sm:$0x1]
  %v33 = vld [vmem:[%s2 + $0xd] sm:$0x1]
  %v34 = vld [vmem:[%s2 + $0xe] sm:$0x1]
  %v35 = vld [vmem:[%s2 + $0xf] sm:$0x1]
  %v36 = vld [vmem:[%s2 + $0x10] sm:$0x1]
  %v37 = vld [vmem:[%s2 + $0x11] sm:$0x1]
  %v38 = vld [vmem:[%s2 + $0x12] sm:$0x1]
  %v39 = vld [vmem:[%s2 + $0x13] sm:$0x1]
  %v40 = vld [vmem:[%s2 + $0x14] sm:$0x1]
  %v41 = vld [vmem:[%s2 + $0x15] sm:$0x1]
  %v42 = vld [vmem:[%s2 + $0x16] sm:$0x1]
  %v43 = vld [vmem:[%s2 + $0x17] sm:$0x1]
  %v44 = vld [vmem:[%s2 + $0x18] sm:$0x1]
  %v45 = vld [vmem:[%s2 + $0x19] sm:$0x1]
  %v46 = vld [vmem:[%s2 + $0x1a] sm:$0x1]
  %v47 = vld [vmem:[%s2 + $0x1b] sm:$0x1]
  %v48 = vld [vmem:[%s2 + $0x1c] sm:$0x1]
  %v49 = vld [vmem:[%s2 + $0x1d] sm:$0x1]
  %v50 = vld [vmem:[%s2 + $0x1e] sm:$0x1]
  %v51 = vld [vmem:[%s2 + $0x1f] sm:$0x1]
  %v52 = vld [vmem:[%s2 + $0x20] sm:$0x1]
  %v53 = vld [vmem:[%s2 + $0x21] sm:$0x1]
  %v54 = vld [vmem:[%s2 + $0x22] sm:$0x1]
  %v55 = vld [vmem:[%s2 + $0x23] sm:$0x1]
  %v56 = vld [vmem:[%s2 + $0x24] sm:$0x1]
  %v57 = vld [vmem:[%s2 + $0x25] sm:$0x1]
  %v58 = vld [vmem:[%s2 + $0x26] sm:$0x1]
  %v59 = vld [vmem:[%s2 + $0x27] sm:$0x1]
  %v60 = vld [vmem:[%s2 + $0x28] sm:$0x1]
  %v61 = vld [vmem:[%s2 + $0x29] sm:$0x1]
  %v62 = vld [vmem:[%s2 + $0x2a] sm:$0x1]
  %v63 = vld [vmem:[%s2 + $0x2b] sm:$0x1]
  %v64 = vld [vmem:[%s2 + $0x2c] sm:$0x1]
  %v65 = vld [vmem:[%s2 + $0x2d] sm:$0x1]
  %v66 = vld [vmem:[%s2 + $0x2e] sm:$0x1]
  %v67 = vld [vmem:[%s2 + $0x2f] sm:$0x1]
  %v68 = vld [vmem:[%s2 + $0x30] sm:$0x1]
  %v69 = vld [vmem:[%s2 + $0x31] sm:$0x1]
  %v70 = vld [vmem:[%s2 + $0x32] sm:$0x1]
  %v71 = vld [vmem:[%s2 + $0x33] sm:$0x1]
  %v72 = vld [vmem:[%s2 + $0x34] sm:$0x1]
  %v73 = vld [vmem:[%s2 + $0x35] sm:$0x1]
  %v74 = vld [vmem:[%s2 + $0x36] sm:$0x1]
  %v75 = vld [vmem:[%s2 + $0x37] sm:$0x1]
  %v76 = vld [vmem:[%s2 + $0x38] sm:$0x1]
  %v77 = vld [vmem:[%s2 + $0x39] sm:$0x1]
  %v78 = vld [vmem:[%s2 + $0x3a] sm:$0x1]
  %v79 = vld [vmem:[%s2 + $0x3b] sm:$0x1]
  %v80 = vld [vmem:[%s2 + $0x3c] sm:$0x1]
  %v81 = vld [vmem:[%s2 + $0x3d] sm:$0x1]
  %v82 = vld [vmem:[%s2 + $0x3e] sm:$0x1]
  %v83 = vld [vmem:[%s2 + $0x3f] sm:$0x1]
  %v84 = vld [vmem:[%s2 + $0x40] sm:$0x1]
  %v85 = vld [vmem:[%s2 + $0x41] sm:$0x1]
  %v86 = vld [vmem:[%s2 + $0x42] sm:$0x1]
  %v87 = vld [vmem:[%s2 + $0x43] sm:$0x1]
  %v88 = vld [vmem:[%s2 + $0x44] sm:$0x1]
  %v89 = vld [vmem:[%s2 + $0x45] sm:$0x1]
  %v90 = vld [vmem:[%s2 + $0x46] sm:$0x1]
  %v91 = vld [vmem:[%s2 + $0x47] sm:$0x1]
  %v92 = vld [vmem:[%s2 + $0x48] sm:$0x1]
  %v93 = vld [vmem:[%s2 + $0x49] sm:$0x1]
  %v94 = vld [vmem:[%s2 + $0x4a] sm:$0x1]
  %v95 = vld [vmem:[%s2 + $0x4b] sm:$0x1]
  %v96 = vld [vmem:[%s2 + $0x4c] sm:$0x1]
  %v97 = vld [vmem:[%s2 + $0x4d] sm:$0x1]
  %v98 = vld [vmem:[%s2 + $0x4e] sm:$0x1]
  %v99 = vld [vmem:[%s2 + $0x4f] sm:$0x1]
  %v100 = vld [vmem:[%s2 + $0x50] sm:$0x1]
  %v101 = vld [vmem:[%s2 + $0x51] sm:$0x1]
  %v102 = vld [vmem:[%s2 + $0x52] sm:$0x1]
  %v103 = vld [vmem:[%s2 + $0x53] sm:$0x1]
  %v104 = vld [vmem:[%s2 + $0x54] sm:$0x1]
  %v105 = vld [vmem:[%s2 + $0x55] sm:$0x1]
  %v106 = vld [vmem:[%s2 + $0x56] sm:$0x1]
  %v107 = vld [vmem:[%s2 + $0x57] sm:$0x1]
  %v108 = vld [vmem:[%s2 + $0x58] sm:$0x1]
  %v109 = vld [vmem:[%s2 + $0x59] sm:$0x1]
  %v110 = vld [vmem:[%s2 + $0x5a] sm:$0x1]
  %v111 = vld [vmem:[%s2 + $0x5b] sm:$0x1]
  %v112 = vld [vmem:[%s2 + $0x5c] sm:$0x1]
  %v113 = vld [vmem:[%s2 + $0x5d] sm:$0x1]
  %v114 = vld [vmem:[%s2 + $0x5e] sm:$0x1]
  %v115 = vld [vmem:[%s2 + $0x5f] sm:$0x1]
  %v116 = vld [vmem:[%s2 + $0x60] sm:$0x1]
  %v117 = vld [vmem:[%s2 + $0x61] sm:$0x1]
  %v118 = vld [vmem:[%s2 + $0x62] sm:$0x1]
  %v119 = vld [vmem:[%s2 + $0x63] sm:$0x1]
  %v120 = vld [vmem:[%s2 + $0x64] sm:$0x1]
  %v121 = vld [vmem:[%s2 + $0x65] sm:$0x1]
  %v122 = vld [vmem:[%s2 + $0x66] sm:$0x1]
  %v123 = vld [vmem:[%s2 + $0x67] sm:$0x1]
  %v124 = vld [vmem:[%s2 + $0x68] sm:$0x1]
  %v125 = vld [vmem:[%s2 + $0x69] sm:$0x1]
  %v126 = vld [vmem:[%s2 + $0x6a] sm:$0x1]
  %v127 = vld [vmem:[%s2 + $0x6b] sm:$0x1]
  %v128 = vld [vmem:[%s2 + $0x6c] sm:$0x1]
  %v129 = vld [vmem:[%s2 + $0x6d] sm:$0x1]
  %v130 = vld [vmem:[%s2 + $0x6e] sm:$0x1]
  %v131 = vld [vmem:[%s2 + $0x6f] sm:$0x1]
  %v132 = vld [vmem:[%s2 + $0x70] sm:$0x1]
  %v133 = vld [vmem:[%s2 + $0x71] sm:$0x1]
  %v134 = vld [vmem:[%s2 + $0x72] sm:$0x1]
  %v135 = vld [vmem:[%s2 + $0x73] sm:$0x1]
  %v136 = vld [vmem:[%s2 + $0x74] sm:$0x1]
  %v137 = vld [vmem:[%s2 + $0x75] sm:$0x1]
  %v138 = vld [vmem:[%s2 + $0x76] sm:$0x1]
  %v139 = vld [vmem:[%s2 + $0x77] sm:$0x1]
  %v140 = vld [vmem:[%s2 + $0x78] sm:$0x1]
  %v141 = vld [vmem:[%s2 + $0x79] sm:$0x1]
  %v142 = vld [vmem:[%s2 + $0x7a] sm:$0x1]
  %v143 = vld [vmem:[%s2 + $0x7b] sm:$0x1]
  %v144 = vld [vmem:[%s2 + $0x7c] sm:$0x1]
  %v145 = vld [vmem:[%s2 + $0x7d] sm:$0x1]
  %v146 = vld [vmem:[%s2 + $0x7e] sm:$0x1]
  %v147 = vld [vmem:[%s2 + $0x7f] sm:$0x1]
  %v148 = vld [vmem:[%s2 + $0x80] sm:$0x1]
  %v149 = vld [vmem:[%s2 + $0x81] sm:$0x1]
  %v150 = vld [vmem:[%s2 + $0x82] sm:$0x1]
  %v151 = vld [vmem:[%s2 + $0x83] sm:$0x1]
  %v152 = vld [vmem:[%s2 + $0x84] sm:$0x1]
  %v153 = vld [vmem:[%s2 + $0x85] sm:$0x1]
  %v154 = vld [vmem:[%s2 + $0x86] sm:$0x1]
  %v155 = vld [vmem:[%s2 + $0x87] sm:$0x1]
  %v156 = vld [vmem:[%s2 + $0x88] sm:$0x1]
  %v157 = vld [vmem:[%s2 + $0x89] sm:$0x1]
  %v158 = vld [vmem:[%s2 + $0x8a] sm:$0x1]
  %v159 = vld [vmem:[%s2 + $0x8b] sm:$0x1]
  %v160 = vld [vmem:[%s2 + $0x8c] sm:$0x1]
  %v161 = vld [vmem:[%s2 + $0x8d] sm:$0x1]
  %v162 = vld [vmem:[%s2 + $0x8e] sm:$0x1]
  %v163 = vld [vmem:[%s2 + $0x8f] sm:$0x1]
  %v164 = vld [vmem:[%s2 + $0x90] sm:$0x1]
  %v165 = vld [vmem:[%s2 + $0x91] sm:$0x1]
  %v166 = vld [vmem:[%s2 + $0x92] sm:$0x1]
  %v167 = vld [vmem:[%s2 + $0x93] sm:$0x1]
  %v168 = vld [vmem:[%s2 + $0x94] sm:$0x1]
  %v169 = vld [vmem:[%s2 + $0x95] sm:$0x1]
  %v170 = vld [vmem:[%s2 + $0x96] sm:$0x1]
  %v171 = vld [vmem:[%s2 + $0x97] sm:$0x1]
  %v172 = vld [vmem:[%s2 + $0x98] sm:$0x1]
  %v173 = vld [vmem:[%s2 + $0x99] sm:$0x1]
  %v174 = vld [vmem:[%s2 + $0x9a] sm:$0x1]
  %v175 = vld [vmem:[%s2 + $0x9b] sm:$0x1]
  %v176 = vld [vmem:[%s2 + $0x9c] sm:$0x1]
  %v177 = vld [vmem:[%s2 + $0x9d] sm:$0x1]
  %v178 = vld [vmem:[%s2 + $0x9e] sm:$0x1]
  %v179 = vld [vmem:[%s2 + $0x9f] sm:$0x1]
  %v180 = vld [vmem:[%s2 + $0xa0] sm:$0x1]
  %v181 = vld [vmem:[%s2 + $0xa1] sm:$0x1]
  %v182 = vld [vmem:[%s2 + $0xa2] sm:$0x1]
  %v183 = vld [vmem:[%s2 + $0xa3] sm:$0x1]
  %v184 = vld [vmem:[%s2 + $0xa4] sm:$0x1]
  %v185 = vld [vmem:[%s2 + $0xa5] sm:$0x1]
  %v186 = vld [vmem:[%s2 + $0xa6] sm:$0x1]
  %v187 = vld [vmem:[%s2 + $0xa7] sm:$0x1]
  %v188 = vld [vmem:[%s2 + $0xa8] sm:$0x1]
  %v189 = vld [vmem:[%s2 + $0xa9] sm:$0x1]
  %v190 = vld [vmem:[%s2 + $0xaa] sm:$0x1]
  %v191 = vld [vmem:[%s2 + $0xab] sm:$0x1]
  %v192 = vld [vmem:[%s2 + $0xac] sm:$0x1]
  %v193 = vld [vmem:[%s2 + $0xad] sm:$0x1]
  %v194 = vld [vmem:[%s2 + $0xae] sm:$0x1]
  %v195 = vld [vmem:[%s2 + $0xaf] sm:$0x1]
  %v196 = vld [vmem:[%s2 + $0xb0] sm:$0x1]
  %v197 = vld [vmem:[%s2 + $0xb1] sm:$0x1]
  %v198 = vld [vmem:[%s2 + $0xb2] sm:$0x1]
  %v199 = vld [vmem:[%s2 + $0xb3] sm:$0x1]
  %v200 = vld [vmem:[%s2 + $0xb4] sm:$0x1]
  %v201 = vld [vmem:[%s2 + $0xb5] sm:$0x1]
  %v202 = vld [vmem:[%s2 + $0xb6] sm:$0x1]
  %v203 = vld [vmem:[%s2 + $0xb7] sm:$0x1]
  %v204 = vld [vmem:[%s2 + $0xb8] sm:$0x1]
  %v205 = vld [vmem:[%s2 + $0xb9] sm:$0x1]
  %v206 = vld [vmem:[%s2 + $0xba] sm:$0x1]
  %v207 = vld [vmem:[%s2 + $0xbb] sm:$0x1]
  %v208 = vld [vmem:[%s2 + $0xbc] sm:$0x1]
  %v209 = vld [vmem:[%s2 + $0xbd] sm:$0x1]
  %v210 = vld [vmem:[%s2 + $0xbe] sm:$0x1]
  %v211 = vld [vmem:[%s2 + $0xbf] sm:$0x1]
  %v212 = vld [vmem:[%s2 + $0xc0] sm:$0x1]
  %v213 = vld [vmem:[%s2 + $0xc1] sm:$0x1]
  %v214 = vld [vmem:[%s2 + $0xc2] sm:$0x1]
  %v215 = vld [vmem:[%s2 + $0xc3] sm:$0x1]
  %v216 = vld [vmem:[%s2 + $0xc4] sm:$0x1]
  %v217 = vld [vmem:[%s2 + $0xc5] sm:$0x1]
  %v218 = vld [vmem:[%s2 + $0xc6] sm:$0x1]
  %v219 = vld [vmem:[%s2 + $0xc7] sm:$0x1]
  %v220 = vld [vmem:[%s2 + $0xc8] sm:$0x1]
  %v221 = vld [vmem:[%s2 + $0xc9] sm:$0x1]
  %v222 = vld [vmem:[%s2 + $0xca] sm:$0x1]
  %v223 = vld [vmem:[%s2 + $0xcb] sm:$0x1]
  %v224 = vld [vmem:[%s2 + $0xcc] sm:$0x1]
  %v225 = vld [vmem:[%s2 + $0xcd] sm:$0x1]
  %v226 = vld [vmem:[%s2 + $0xce] sm:$0x1]
  %v227 = vld [vmem:[%s2 + $0xcf] sm:$0x1]
  %v228 = vld [vmem:[%s2 + $0xd0] sm:$0x1]
  %v229 = vld [vmem:[%s2 + $0xd1] sm:$0x1]
  %v230 = vld [vmem:[%s2 + $0xd2] sm:$0x1]
  %v231 = vld [vmem:[%s2 + $0xd3] sm:$0x1]
  %v232 = vld [vmem:[%s2 + $0xd4] sm:$0x1]
  %v233 = vld [vmem:[%s2 + $0xd5] sm:$0x1]
  %v234 = vld [vmem:[%s2 + $0xd6] sm:$0x1]
  %v235 = vld [vmem:[%s2 + $0xd7] sm:$0x1]
  %v236 = vld [vmem:[%s2 + $0xd8] sm:$0x1]
  %v237 = vld [vmem:[%s2 + $0xd9] sm:$0x1]
  %v238 = vld [vmem:[%s2 + $0xda] sm:$0x1]
  %v239 = vld [vmem:[%s2 + $0xdb] sm:$0x1]
  %v240 = vld [vmem:[%s2 + $0xdc] sm:$0x1]
  %v241 = vld [vmem:[%s2 + $0xdd] sm:$0x1]
  %v242 = vld [vmem:[%s2 + $0xde] sm:$0x1]
  %v243 = vld [vmem:[%s2 + $0xdf] sm:$0x1]
  %v244 = vld [vmem:[%s2 + $0xe0] sm:$0x1]
  %v245 = vld [vmem:[%s2 + $0xe1] sm:$0x1]
  %v246 = vld [vmem:[%s2 + $0xe2] sm:$0x1]
  %v247 = vld [vmem:[%s2 + $0xe3] sm:$0x1]
  %v248 = vld [vmem:[%s2 + $0xe4] sm:$0x1]
  %v249 = vld [vmem:[%s2 + $0xe5] sm:$0x1]
  %v250 = vld [vmem:[%s2 + $0xe6] sm:$0x1]
  %v251 = vld [vmem:[%s2 + $0xe7] sm:$0x1]
  %v252 = vld [vmem:[%s2 + $0xe8] sm:$0x1]
  %v253 = vld [vmem:[%s2 + $0xe9] sm:$0x1]
  %v254 = vld [vmem:[%s2 + $0xea] sm:$0x1]
  %v255 = vld [vmem:[%s2 + $0xeb] sm:$0x1]
  %v256 = vld [vmem:[%s2 + $0xec] sm:$0x1]
  %v257 = vld [vmem:[%s2 + $0xed] sm:$0x1]
  %v258 = vld [vmem:[%s2 + $0xee] sm:$0x1]
  %v259 = vld [vmem:[%s2 + $0xef] sm:$0x1]
  %v260 = vld [vmem:[%s2 + $0xf0] sm:$0x1]
  %v261 = vld [vmem:[%s2 + $0xf1] sm:$0x1]
  %v262 = vld [vmem:[%s2 + $0xf2] sm:$0x1]
  %v263 = vld [vmem:[%s2 + $0xf3] sm:$0x1]
  %v264 = vld [vmem:[%s2 + $0xf4] sm:$0x1]
  %v265 = vld [vmem:[%s2 + $0xf5] sm:$0x1]
  %v266 = vld [vmem:[%s2 + $0xf6] sm:$0x1]
  %v267 = vld [vmem:[%s2 + $0xf7] sm:$0x1]
  %v268 = vld [vmem:[%s2 + $0xf8] sm:$0x1]
  %v269 = vld [vmem:[%s2 + $0xf9] sm:$0x1]
  %v270 = vld [vmem:[%s2 + $0xfa] sm:$0x1]
  %v271 = vld [vmem:[%s2 + $0xfb] sm:$0x1]
  %v272 = vld [vmem:[%s2 + $0xfc] sm:$0x1]
  %v273 = vld [vmem:[%s2 + $0xfd] sm:$0x1]
  %v274 = vld [vmem:[%s2 + $0xfe] sm:$0x1]
  %v275 = vld [vmem:[%s2 + $0xff] sm:$0x1]
  %v276 = vld [vmem:[%s2 + $0x100] sm:$0x1]
  %v277 = vld [vmem:[%s2 + $0x101] sm:$0x1]
  %v278 = vld [vmem:[%s2 + $0x102] sm:$0x1]
  %v279 = vld [vmem:[%s2 + $0x103] sm:$0x1]
  %v280 = vld [vmem:[%s2 + $0x104] sm:$0x1]
  %v281 = vld [vmem:[%s2 + $0x105] sm:$0x1]
  %v282 = vld [vmem:[%s2 + $0x106] sm:$0x1]
  %v283 = vld [vmem:[%s2 + $0x107] sm:$0x1]
  %v284 = vld [vmem:[%s2 + $0x108] sm:$0x1]
  %v285 = vld [vmem:[%s2 + $0x109] sm:$0x1]
  %v286 = vld [vmem:[%s2 + $0x10a] sm:$0x1]
  %v287 = vld [vmem:[%s2 + $0x10b] sm:$0x1]
  %v288 = vld [vmem:[%s2 + $0x10c] sm:$0x1]
  %v289 = vld [vmem:[%s2 + $0x10d] sm:$0x1]
  %v290 = vld [vmem:[%s2 + $0x10e] sm:$0x1]
  %v291 = vld [vmem:[%s2 + $0x10f] sm:$0x1]
  %v292 = vld [vmem:[%s2 + $0x110] sm:$0x1]
  %v293 = vld [vmem:[%s2 + $0x111] sm:$0x1]
  %v294 = vld [vmem:[%s2 + $0x112] sm:$0x1]
  %v295 = vld [vmem:[%s2 + $0x113] sm:$0x1]
  %v296 = vld [vmem:[%s2 + $0x114] sm:$0x1]
  %v297 = vld [vmem:[%s2 + $0x115] sm:$0x1]
  %v298 = vld [vmem:[%s2 + $0x116] sm:$0x1]
  %v299 = vld [vmem:[%s2 + $0x117] sm:$0x1]
  %v300 = vld [vmem:[%s2 + $0x118] sm:$0x1]
  %v301 = vld [vmem:[%s2 + $0x119] sm:$0x1]
  %v302 = vld [vmem:[%s2 + $0x11a] sm:$0x1]
  %v303 = vld [vmem:[%s2 + $0x11b] sm:$0x1]
  %v304 = vld [vmem:[%s2 + $0x11c] sm:$0x1]
  %v305 = vld [vmem:[%s2 + $0x11d] sm:$0x1]
  %v306 = vld [vmem:[%s2 + $0x11e] sm:$0x1]
  %v307 = vld [vmem:[%s2 + $0x11f] sm:$0x1]
  %v308 = vld [vmem:[%s2 + $0x120] sm:$0x1]
  %v309 = vld [vmem:[%s2 + $0x121] sm:$0x1]
  %v310 = vld [vmem:[%s2 + $0x122] sm:$0x1]
  %v311 = vld [vmem:[%s2 + $0x123] sm:$0x1]
  %v312 = vld [vmem:[%s2 + $0x124] sm:$0x1]
  %v313 = vld [vmem:[%s2 + $0x125] sm:$0x1]
  %v314 = vld [vmem:[%s2 + $0x126] sm:$0x1]
  %v315 = vld [vmem:[%s2 + $0x127] sm:$0x1]
  %v316 = vld [vmem:[%s2 + $0x128] sm:$0x1]
  %v317 = vld [vmem:[%s2 + $0x129] sm:$0x1]
  %v318 = vld [vmem:[%s2 + $0x12a] sm:$0x1]
  %v319 = vld [vmem:[%s2 + $0x12b] sm:$0x1]
  %v320 = vld [vmem:[%s2 + $0x12c] sm:$0x1]
  %v321 = vld [vmem:[%s2 + $0x12d] sm:$0x1]
  %v322 = vld [vmem:[%s2 + $0x12e] sm:$0x1]
  %v323 = vld [vmem:[%s2 + $0x12f] sm:$0x1]
  %v324 = vld [vmem:[%s2 + $0x130] sm:$0x1]
  %v325 = vld [vmem:[%s2 + $0x131] sm:$0x1]
  %v326 = vld [vmem:[%s2 + $0x132] sm:$0x1]
  %v327 = vld [vmem:[%s2 + $0x133] sm:$0x1]
  %v328 = vld [vmem:[%s2 + $0x134] sm:$0x1]
  %v329 = vld [vmem:[%s2 + $0x135] sm:$0x1]
  %v330 = vld [vmem:[%s2 + $0x136] sm:$0x1]
  %v331 = vld [vmem:[%s2 + $0x137] sm:$0x1]
  %v332 = vld [vmem:[%s2 + $0x138] sm:$0x1]
  %v333 = vld [vmem:[%s2 + $0x139] sm:$0x1]
  %v334 = vld [vmem:[%s2 + $0x13a] sm:$0x1]
  %v335 = vld [vmem:[%s2 + $0x13b] sm:$0x1]
  %v336 = vld [vmem:[%s2 + $0x13c] sm:$0x1]
  %v337 = vld [vmem:[%s2 + $0x13d] sm:$0x1]
  %v338 = vld [vmem:[%s2 + $0x13e] sm:$0x1]
  %v339 = vld [vmem:[%s2 + $0x13f] sm:$0x1]
  %v340 = vld [vmem:[%s2 + $0x140] sm:$0x1]
  %v341 = vld [vmem:[%s2 + $0x141] sm:$0x1]
  %v342 = vld [vmem:[%s2 + $0x142] sm:$0x1]
  %v343 = vld [vmem:[%s2 + $0x143] sm:$0x1]
  %v344 = vld [vmem:[%s2 + $0x144] sm:$0x1]
  %v345 = vld [vmem:[%s2 + $0x145] sm:$0x1]
  %v346 = vld [vmem:[%s2 + $0x146] sm:$0x1]
  %v347 = vld [vmem:[%s2 + $0x147] sm:$0x1]
  %v348 = vld [vmem:[%s2 + $0x148] sm:$0x1]
  %v349 = vld [vmem:[%s2 + $0x149] sm:$0x1]
  %v350 = vld [vmem:[%s2 + $0x14a] sm:$0x1]
  %v351 = vld [vmem:[%s2 + $0x14b] sm:$0x1]
  %v352 = vld [vmem:[%s2 + $0x14c] sm:$0x1]
  %v353 = vld [vmem:[%s2 + $0x14d] sm:$0x1]
  %v354 = vld [vmem:[%s2 + $0x14e] sm:$0x1]
  %v355 = vld [vmem:[%s2 + $0x14f] sm:$0x1]
  %v356 = vld [vmem:[%s2 + $0x150] sm:$0x1]
  %v357 = vld [vmem:[%s2 + $0x151] sm:$0x1]
  %v358 = vld [vmem:[%s2 + $0x152] sm:$0x1]
  %v359 = vld [vmem:[%s2 + $0x153] sm:$0x1]
  %v360 = vld [vmem:[%s2 + $0x154] sm:$0x1]
  %v361 = vld [vmem:[%s2 + $0x155] sm:$0x1]
  %v362 = vld [vmem:[%s2 + $0x156] sm:$0x1]
  %v363 = vld [vmem:[%s2 + $0x157] sm:$0x1]
  %v364 = vld [vmem:[%s2 + $0x158] sm:$0x1]
  %v365 = vld [vmem:[%s2 + $0x159] sm:$0x1]
  %v366 = vld [vmem:[%s2 + $0x15a] sm:$0x1]
  %v367 = vld [vmem:[%s2 + $0x15b] sm:$0x1]
  %v368 = vld [vmem:[%s2 + $0x15c] sm:$0x1]
  %v369 = vld [vmem:[%s2 + $0x15d] sm:$0x1]
  %v370 = vld [vmem:[%s2 + $0x15e] sm:$0x1]
  %v371 = vld [vmem:[%s2 + $0x15f] sm:$0x1]
  %v372 = vld [vmem:[%s2 + $0x160] sm:$0x1]
  %v373 = vld [vmem:[%s2 + $0x161] sm:$0x1]
  %v374 = vld [vmem:[%s2 + $0x162] sm:$0x1]
  %v375 = vld [vmem:[%s2 + $0x163] sm:$0x1]
  %v376 = vld [vmem:[%s2 + $0x164] sm:$0x1]
  %v377 = vld [vmem:[%s2 + $0x165] sm:$0x1]
  %v378 = vld [vmem:[%s2 + $0x166] sm:$0x1]
  %v379 = vld [vmem:[%s2 + $0x167] sm:$0x1]
  %v380 = vld [vmem:[%s2 + $0x168] sm:$0x1]
  %v381 = vld [vmem:[%s2 + $0x169] sm:$0x1]
  %v382 = vld [vmem:[%s2 + $0x16a] sm:$0x1]
  %v383 = vld [vmem:[%s2 + $0x16b] sm:$0x1]
  %v384 = vld [vmem:[%s2 + $0x16c] sm:$0x1]
  %v385 = vld [vmem:[%s2 + $0x16d] sm:$0x1]
  %v386 = vld [vmem:[%s2 + $0x16e] sm:$0x1]
  %v387 = vld [vmem:[%s2 + $0x16f] sm:$0x1]
  %v388 = vld [vmem:[%s2 + $0x170] sm:$0x1]
  %v389 = vld [vmem:[%s2 + $0x171] sm:$0x1]
  %v390 = vld [vmem:[%s2 + $0x172] sm:$0x1]
  %v391 = vld [vmem:[%s2 + $0x173] sm:$0x1]
  %v392 = vld [vmem:[%s2 + $0x174] sm:$0x1]
  %v393 = vld [vmem:[%s2 + $0x175] sm:$0x1]
  %v394 = vld [vmem:[%s2 + $0x176] sm:$0x1]
  %v395 = vld [vmem:[%s2 + $0x177] sm:$0x1]
  %v396 = vld [vmem:[%s2 + $0x178] sm:$0x1]
  %v397 = vld [vmem:[%s2 + $0x179] sm:$0x1]
  %v398 = vld [vmem:[%s2 + $0x17a] sm:$0x1]
  %v399 = vld [vmem:[%s2 + $0x17b] sm:$0x1]
  %v400 = vld [vmem:[%s2 + $0x17c] sm:$0x1]
  %v401 = vld [vmem:[%s2 + $0x17d] sm:$0x1]
  %v402 = vld [vmem:[%s2 + $0x17e] sm:$0x1]
  %v403 = vld [vmem:[%s2 + $0x17f] sm:$0x1]
  %v404 = vld [vmem:[%s2 + $0x180] sm:$0x1]
  %v405 = vld [vmem:[%s2 + $0x181] sm:$0x1]
  %v406 = vld [vmem:[%s2 + $0x182] sm:$0x1]
  %v407 = vld [vmem:[%s2 + $0x183] sm:$0x1]
  %v408 = vld [vmem:[%s2 + $0x184] sm:$0x1]
  %v409 = vld [vmem:[%s2 + $0x185] sm:$0x1]
  %v410 = vld [vmem:[%s2 + $0x186] sm:$0x1]
  %v411 = vld [vmem:[%s2 + $0x187] sm:$0x1]
  %v412 = vld [vmem:[%s2 + $0x188] sm:$0x1]
  %v413 = vld [vmem:[%s2 + $0x189] sm:$0x1]
  %v414 = vld [vmem:[%s2 + $0x18a] sm:$0x1]
  %v415 = vld [vmem:[%s2 + $0x18b] sm:$0x1]
  %v416 = vld [vmem:[%s2 + $0x18c] sm:$0x1]
  %v417 = vld [vmem:[%s2 + $0x18d] sm:$0x1]
  %v418 = vld [vmem:[%s2 + $0x18e] sm:$0x1]
  %v419 = vld [vmem:[%s2 + $0x18f] sm:$0x1]
  %v420 = vld [vmem:[%s2 + $0x190] sm:$0x1]
  %v421 = vld [vmem:[%s2 + $0x191] sm:$0x1]
  %v422 = vld [vmem:[%s2 + $0x192] sm:$0x1]
  %v423 = vld [vmem:[%s2 + $0x193] sm:$0x1]
  %v424 = vld [vmem:[%s2 + $0x194] sm:$0x1]
  %v425 = vld [vmem:[%s2 + $0x195] sm:$0x1]
  %v426 = vld [vmem:[%s2 + $0x196] sm:$0x1]
  %v427 = vld [vmem:[%s2 + $0x197] sm:$0x1]
  %v428 = vld [vmem:[%s2 + $0x198] sm:$0x1]
  %v429 = vld [vmem:[%s2 + $0x199] sm:$0x1]
  %v430 = vld [vmem:[%s2 + $0x19a] sm:$0x1]
  %v431 = vld [vmem:[%s2 + $0x19b] sm:$0x1]
  %v432 = vld [vmem:[%s2 + $0x19c] sm:$0x1]
  %v433 = vld [vmem:[%s2 + $0x19d] sm:$0x1]
  %v434 = vld [vmem:[%s2 + $0x19e] sm:$0x1]
  %v435 = vld [vmem:[%s2 + $0x19f] sm:$0x1]
  %v436 = vld [vmem:[%s2 + $0x1a0] sm:$0x1]
  %v437 = vld [vmem:[%s2 + $0x1a1] sm:$0x1]
  %v438 = vld [vmem:[%s2 + $0x1a2] sm:$0x1]
  %v439 = vld [vmem:[%s2 + $0x1a3] sm:$0x1]
  %v440 = vld [vmem:[%s2 + $0x1a4] sm:$0x1]
  %v441 = vld [vmem:[%s2 + $0x1a5] sm:$0x1]
  %v442 = vld [vmem:[%s2 + $0x1a6] sm:$0x1]
  %v443 = vld [vmem:[%s2 + $0x1a7] sm:$0x1]
  %v444 = vld [vmem:[%s2 + $0x1a8] sm:$0x1]
  %v445 = vld [vmem:[%s2 + $0x1a9] sm:$0x1]
  %v446 = vld [vmem:[%s2 + $0x1aa] sm:$0x1]
  %v447 = vld [vmem:[%s2 + $0x1ab] sm:$0x1]
  %v448 = vld [vmem:[%s2 + $0x1ac] sm:$0x1]
  %v449 = vld [vmem:[%s2 + $0x1ad] sm:$0x1]
  %v450 = vld [vmem:[%s2 + $0x1ae] sm:$0x1]
  %v451 = vld [vmem:[%s2 + $0x1af] sm:$0x1]
  %v452 = vld [vmem:[%s2 + $0x1b0] sm:$0x1]
  %v453 = vld [vmem:[%s2 + $0x1b1] sm:$0x1]
  %v454 = vld [vmem:[%s2 + $0x1b2] sm:$0x1]
  %v455 = vld [vmem:[%s2 + $0x1b3] sm:$0x1]
  %v456 = vld [vmem:[%s2 + $0x1b4] sm:$0x1]
  %v457 = vld [vmem:[%s2 + $0x1b5] sm:$0x1]
  %v458 = vld [vmem:[%s2 + $0x1b6] sm:$0x1]
  %v459 = vld [vmem:[%s2 + $0x1b7] sm:$0x1]
  %v460 = vld [vmem:[%s2 + $0x1b8] sm:$0x1]
  %v461 = vld [vmem:[%s2 + $0x1b9] sm:$0x1]
  %v462 = vld [vmem:[%s2 + $0x1ba] sm:$0x1]
  %v463 = vld [vmem:[%s2 + $0x1bb] sm:$0x1]
  %v464 = vld [vmem:[%s2 + $0x1bc] sm:$0x1]
  %v465 = vld [vmem:[%s2 + $0x1bd] sm:$0x1]
  %v466 = vld [vmem:[%s2 + $0x1be] sm:$0x1]
  %v467 = vld [vmem:[%s2 + $0x1bf] sm:$0x1]
  %v468 = vld [vmem:[%s2 + $0x1c0] sm:$0x1]
  %v469 = vld [vmem:[%s2 + $0x1c1] sm:$0x1]
  %v470 = vld [vmem:[%s2 + $0x1c2] sm:$0x1]
  %v471 = vld [vmem:[%s2 + $0x1c3] sm:$0x1]
  %v472 = vld [vmem:[%s2 + $0x1c4] sm:$0x1]
  %v473 = vld [vmem:[%s2 + $0x1c5] sm:$0x1]
  %v474 = vld [vmem:[%s2 + $0x1c6] sm:$0x1]
  %v475 = vld [vmem:[%s2 + $0x1c7] sm:$0x1]
  %v476 = vld [vmem:[%s2 + $0x1c8] sm:$0x1]
  %v477 = vld [vmem:[%s2 + $0x1c9] sm:$0x1]
  %v478 = vld [vmem:[%s2 + $0x1ca] sm:$0x1]
  %v479 = vld [vmem:[%s2 + $0x1cb] sm:$0x1]
  %v480 = vld [vmem:[%s2 + $0x1cc] sm:$0x1]
  %v481 = vld [vmem:[%s2 + $0x1cd] sm:$0x1]
  %v482 = vld [vmem:[%s2 + $0x1ce] sm:$0x1]
  %v483 = vld [vmem:[%s2 + $0x1cf] sm:$0x1]
  %v484 = vld [vmem:[%s2 + $0x1d0] sm:$0x1]
  %v485 = vld [vmem:[%s2 + $0x1d1] sm:$0x1]
  %v486 = vld [vmem:[%s2 + $0x1d2] sm:$0x1]
  %v487 = vld [vmem:[%s2 + $0x1d3] sm:$0x1]
  %v488 = vld [vmem:[%s2 + $0x1d4] sm:$0x1]
  %v489 = vld [vmem:[%s2 + $0x1d5] sm:$0x1]
  %v490 = vld [vmem:[%s2 + $0x1d6] sm:$0x1]
  %v491 = vld [vmem:[%s2 + $0x1d7] sm:$0x1]
  %v492 = vld [vmem:[%s2 + $0x1d8] sm:$0x1]
  %v493 = vld [vmem:[%s2 + $0x1d9] sm:$0x1]
  %v494 = vld [vmem:[%s2 + $0x1da] sm:$0x1]
  %v495 = vld [vmem:[%s2 + $0x1db] sm:$0x1]
  %v496 = vld [vmem:[%s2 + $0x1dc] sm:$0x1]
  %v497 = vld [vmem:[%s2 + $0x1dd] sm:$0x1]
  %v498 = vld [vmem:[%s2 + $0x1de] sm:$0x1]
  %v499 = vld [vmem:[%s2 + $0x1df] sm:$0x1]
  %v500 = vld [vmem:[%s2 + $0x1e0] sm:$0x1]
  %v501 = vld [vmem:[%s2 + $0x1e1] sm:$0x1]
  %v502 = vld [vmem:[%s2 + $0x1e2] sm:$0x1]
  %v503 = vld [vmem:[%s2 + $0x1e3] sm:$0x1]
  %v504 = vld [vmem:[%s2 + $0x1e4] sm:$0x1]
  %v505 = vld [vmem:[%s2 + $0x1e5] sm:$0x1]
  %v506 = vld [vmem:[%s2 + $0x1e6] sm:$0x1]
  %v507 = vld [vmem:[%s2 + $0x1e7] sm:$0x1]
  %v508 = vld [vmem:[%s2 + $0x1e8] sm:$0x1]
  %v509 = vld [vmem:[%s2 + $0x1e9] sm:$0x1]
  %v510 = vld [vmem:[%s2 + $0x1ea] sm:$0x1]
  %v511 = vld [vmem:[%s2 + $0x1eb] sm:$0x1]
  %v512 = vld [vmem:[%s2 + $0x1ec] sm:$0x1]
  %v513 = vld [vmem:[%s2 + $0x1ed] sm:$0x1]
  %v514 = vld [vmem:[%s2 + $0x1ee] sm:$0x1]
  %v515 = vld [vmem:[%s2 + $0x1ef] sm:$0x1]
  %v516 = vld [vmem:[%s2 + $0x1f0] sm:$0x1]
  %v517 = vld [vmem:[%s2 + $0x1f1] sm:$0x1]
  %v518 = vld [vmem:[%s2 + $0x1f2] sm:$0x1]
  %v519 = vld [vmem:[%s2 + $0x1f3] sm:$0x1]
  %v520 = vld [vmem:[%s2 + $0x1f4] sm:$0x1]
  %v521 = vld [vmem:[%s2 + $0x1f5] sm:$0x1]
  %v522 = vld [vmem:[%s2 + $0x1f6] sm:$0x1]
  %v523 = vld [vmem:[%s2 + $0x1f7] sm:$0x1]
  %v524 = vld [vmem:[%s2 + $0x1f8] sm:$0x1]
  %v525 = vld [vmem:[%s2 + $0x1f9] sm:$0x1]
  %v526 = vld [vmem:[%s2 + $0x1fa] sm:$0x1]
  %v527 = vld [vmem:[%s2 + $0x1fb] sm:$0x1]
  %v528 = vld [vmem:[%s2 + $0x1fc] sm:$0x1]
  %v529 = vld [vmem:[%s2 + $0x1fd] sm:$0x1]
  %v530 = vld [vmem:[%s2 + $0x1fe] sm:$0x1]
  %v531 = vld [vmem:[%s2 + $0x1ff] sm:$0x1]
  %vm532 = vcmask 24576
  %533 = vst.msk [vmem:[%s3] sm:$0x1] %vm532, %v20
  %534 = vst.msk [vmem:[%s3 + $0x1] sm:$0x1] %vm532, %v21
  %535 = vst.msk [vmem:[%s3 + $0x2] sm:$0x1] %vm532, %v22
  %536 = vst.msk [vmem:[%s3 + $0x3] sm:$0x1] %vm532, %v23
  %537 = vst.msk [vmem:[%s3 + $0x4] sm:$0x1] %vm532, %v24
  %538 = vst.msk [vmem:[%s3 + $0x5] sm:$0x1] %vm532, %v25
  %539 = vst.msk [vmem:[%s3 + $0x6] sm:$0x1] %vm532, %v26
  %540 = vst.msk [vmem:[%s3 + $0x7] sm:$0x1] %vm532, %v27
  %541 = vst.msk [vmem:[%s3 + $0x8] sm:$0x1] %vm532, %v28
  %542 = vst.msk [vmem:[%s3 + $0x9] sm:$0x1] %vm532, %v29
  %543 = vst.msk [vmem:[%s3 + $0xa] sm:$0x1] %vm532, %v30
  %544 = vst.msk [vmem:[%s3 + $0xb] sm:$0x1] %vm532, %v31
  %545 = vst.msk [vmem:[%s3 + $0xc] sm:$0x1] %vm532, %v32
  %546 = vst.msk [vmem:[%s3 + $0xd] sm:$0x1] %vm532, %v33
  %547 = vst.msk [vmem:[%s3 + $0xe] sm:$0x1] %vm532, %v34
  %548 = vst.msk [vmem:[%s3 + $0xf] sm:$0x1] %vm532, %v35
  %549 = vst.msk [vmem:[%s3 + $0x10] sm:$0x1] %vm532, %v36
  %550 = vst.msk [vmem:[%s3 + $0x11] sm:$0x1] %vm532, %v37
  %551 = vst.msk [vmem:[%s3 + $0x12] sm:$0x1] %vm532, %v38
  %552 = vst.msk [vmem:[%s3 + $0x13] sm:$0x1] %vm532, %v39
  %553 = vst.msk [vmem:[%s3 + $0x14] sm:$0x1] %vm532, %v40
  %554 = vst.msk [vmem:[%s3 + $0x15] sm:$0x1] %vm532, %v41
  %555 = vst.msk [vmem:[%s3 + $0x16] sm:$0x1] %vm532, %v42
  %556 = vst.msk [vmem:[%s3 + $0x17] sm:$0x1] %vm532, %v43
  %557 = vst.msk [vmem:[%s3 + $0x18] sm:$0x1] %vm532, %v44
  %558 = vst.msk [vmem:[%s3 + $0x19] sm:$0x1] %vm532, %v45
  %559 = vst.msk [vmem:[%s3 + $0x1a] sm:$0x1] %vm532, %v46
  %560 = vst.msk [vmem:[%s3 + $0x1b] sm:$0x1] %vm532, %v47
  %561 = vst.msk [vmem:[%s3 + $0x1c] sm:$0x1] %vm532, %v48
  %562 = vst.msk [vmem:[%s3 + $0x1d] sm:$0x1] %vm532, %v49
  %563 = vst.msk [vmem:[%s3 + $0x1e] sm:$0x1] %vm532, %v50
  %564 = vst.msk [vmem:[%s3 + $0x1f] sm:$0x1] %vm532, %v51
  %565 = vst.msk [vmem:[%s3 + $0x20] sm:$0x1] %vm532, %v52
  %566 = vst.msk [vmem:[%s3 + $0x21] sm:$0x1] %vm532, %v53
  %567 = vst.msk [vmem:[%s3 + $0x22] sm:$0x1] %vm532, %v54
  %568 = vst.msk [vmem:[%s3 + $0x23] sm:$0x1] %vm532, %v55
  %569 = vst.msk [vmem:[%s3 + $0x24] sm:$0x1] %vm532, %v56
  %570 = vst.msk [vmem:[%s3 + $0x25] sm:$0x1] %vm532, %v57
  %571 = vst.msk [vmem:[%s3 + $0x26] sm:$0x1] %vm532, %v58
  %572 = vst.msk [vmem:[%s3 + $0x27] sm:$0x1] %vm532, %v59
  %573 = vst.msk [vmem:[%s3 + $0x28] sm:$0x1] %vm532, %v60
  %574 = vst.msk [vmem:[%s3 + $0x29] sm:$0x1] %vm532, %v61
  %575 = vst.msk [vmem:[%s3 + $0x2a] sm:$0x1] %vm532, %v62
  %576 = vst.msk [vmem:[%s3 + $0x2b] sm:$0x1] %vm532, %v63
  %577 = vst.msk [vmem:[%s3 + $0x2c] sm:$0x1] %vm532, %v64
  %578 = vst.msk [vmem:[%s3 + $0x2d] sm:$0x1] %vm532, %v65
  %579 = vst.msk [vmem:[%s3 + $0x2e] sm:$0x1] %vm532, %v66
  %580 = vst.msk [vmem:[%s3 + $0x2f] sm:$0x1] %vm532, %v67
  %581 = vst.msk [vmem:[%s3 + $0x30] sm:$0x1] %vm532, %v68
  %582 = vst.msk [vmem:[%s3 + $0x31] sm:$0x1] %vm532, %v69
  %583 = vst.msk [vmem:[%s3 + $0x32] sm:$0x1] %vm532, %v70
  %584 = vst.msk [vmem:[%s3 + $0x33] sm:$0x1] %vm532, %v71
  %585 = vst.msk [vmem:[%s3 + $0x34] sm:$0x1] %vm532, %v72
  %586 = vst.msk [vmem:[%s3 + $0x35] sm:$0x1] %vm532, %v73
  %587 = vst.msk [vmem:[%s3 + $0x36] sm:$0x1] %vm532, %v74
  %588 = vst.msk [vmem:[%s3 + $0x37] sm:$0x1] %vm532, %v75
  %589 = vst.msk [vmem:[%s3 + $0x38] sm:$0x1] %vm532, %v76
  %590 = vst.msk [vmem:[%s3 + $0x39] sm:$0x1] %vm532, %v77
  %591 = vst.msk [vmem:[%s3 + $0x3a] sm:$0x1] %vm532, %v78
  %592 = vst.msk [vmem:[%s3 + $0x3b] sm:$0x1] %vm532, %v79
  %593 = vst.msk [vmem:[%s3 + $0x3c] sm:$0x1] %vm532, %v80
  %594 = vst.msk [vmem:[%s3 + $0x3d] sm:$0x1] %vm532, %v81
  %595 = vst.msk [vmem:[%s3 + $0x3e] sm:$0x1] %vm532, %v82
  %596 = vst.msk [vmem:[%s3 + $0x3f] sm:$0x1] %vm532, %v83
  %597 = vst.msk [vmem:[%s3 + $0x40] sm:$0x1] %vm532, %v84
  %598 = vst.msk [vmem:[%s3 + $0x41] sm:$0x1] %vm532, %v85
  %599 = vst.msk [vmem:[%s3 + $0x42] sm:$0x1] %vm532, %v86
  %600 = vst.msk [vmem:[%s3 + $0x43] sm:$0x1] %vm532, %v87
  %601 = vst.msk [vmem:[%s3 + $0x44] sm:$0x1] %vm532, %v88
  %602 = vst.msk [vmem:[%s3 + $0x45] sm:$0x1] %vm532, %v89
  %603 = vst.msk [vmem:[%s3 + $0x46] sm:$0x1] %vm532, %v90
  %604 = vst.msk [vmem:[%s3 + $0x47] sm:$0x1] %vm532, %v91
  %605 = vst.msk [vmem:[%s3 + $0x48] sm:$0x1] %vm532, %v92
  %606 = vst.msk [vmem:[%s3 + $0x49] sm:$0x1] %vm532, %v93
  %607 = vst.msk [vmem:[%s3 + $0x4a] sm:$0x1] %vm532, %v94
  %608 = vst.msk [vmem:[%s3 + $0x4b] sm:$0x1] %vm532, %v95
  %609 = vst.msk [vmem:[%s3 + $0x4c] sm:$0x1] %vm532, %v96
  %610 = vst.msk [vmem:[%s3 + $0x4d] sm:$0x1] %vm532, %v97
  %611 = vst.msk [vmem:[%s3 + $0x4e] sm:$0x1] %vm532, %v98
  %612 = vst.msk [vmem:[%s3 + $0x4f] sm:$0x1] %vm532, %v99
  %613 = vst.msk [vmem:[%s3 + $0x50] sm:$0x1] %vm532, %v100
  %614 = vst.msk [vmem:[%s3 + $0x51] sm:$0x1] %vm532, %v101
  %615 = vst.msk [vmem:[%s3 + $0x52] sm:$0x1] %vm532, %v102
  %616 = vst.msk [vmem:[%s3 + $0x53] sm:$0x1] %vm532, %v103
  %617 = vst.msk [vmem:[%s3 + $0x54] sm:$0x1] %vm532, %v104
  %618 = vst.msk [vmem:[%s3 + $0x55] sm:$0x1] %vm532, %v105
  %619 = vst.msk [vmem:[%s3 + $0x56] sm:$0x1] %vm532, %v106
  %620 = vst.msk [vmem:[%s3 + $0x57] sm:$0x1] %vm532, %v107
  %621 = vst.msk [vmem:[%s3 + $0x58] sm:$0x1] %vm532, %v108
  %622 = vst.msk [vmem:[%s3 + $0x59] sm:$0x1] %vm532, %v109
  %623 = vst.msk [vmem:[%s3 + $0x5a] sm:$0x1] %vm532, %v110
  %624 = vst.msk [vmem:[%s3 + $0x5b] sm:$0x1] %vm532, %v111
  %625 = vst.msk [vmem:[%s3 + $0x5c] sm:$0x1] %vm532, %v112
  %626 = vst.msk [vmem:[%s3 + $0x5d] sm:$0x1] %vm532, %v113
  %627 = vst.msk [vmem:[%s3 + $0x5e] sm:$0x1] %vm532, %v114
  %628 = vst.msk [vmem:[%s3 + $0x5f] sm:$0x1] %vm532, %v115
  %629 = vst.msk [vmem:[%s3 + $0x60] sm:$0x1] %vm532, %v116
  %630 = vst.msk [vmem:[%s3 + $0x61] sm:$0x1] %vm532, %v117
  %631 = vst.msk [vmem:[%s3 + $0x62] sm:$0x1] %vm532, %v118
  %632 = vst.msk [vmem:[%s3 + $0x63] sm:$0x1] %vm532, %v119
  %633 = vst.msk [vmem:[%s3 + $0x64] sm:$0x1] %vm532, %v120
  %634 = vst.msk [vmem:[%s3 + $0x65] sm:$0x1] %vm532, %v121
  %635 = vst.msk [vmem:[%s3 + $0x66] sm:$0x1] %vm532, %v122
  %636 = vst.msk [vmem:[%s3 + $0x67] sm:$0x1] %vm532, %v123
  %637 = vst.msk [vmem:[%s3 + $0x68] sm:$0x1] %vm532, %v124
  %638 = vst.msk [vmem:[%s3 + $0x69] sm:$0x1] %vm532, %v125
  %639 = vst.msk [vmem:[%s3 + $0x6a] sm:$0x1] %vm532, %v126
  %640 = vst.msk [vmem:[%s3 + $0x6b] sm:$0x1] %vm532, %v127
  %641 = vst.msk [vmem:[%s3 + $0x6c] sm:$0x1] %vm532, %v128
  %642 = vst.msk [vmem:[%s3 + $0x6d] sm:$0x1] %vm532, %v129
  %643 = vst.msk [vmem:[%s3 + $0x6e] sm:$0x1] %vm532, %v130
  %644 = vst.msk [vmem:[%s3 + $0x6f] sm:$0x1] %vm532, %v131
  %645 = vst.msk [vmem:[%s3 + $0x70] sm:$0x1] %vm532, %v132
  %646 = vst.msk [vmem:[%s3 + $0x71] sm:$0x1] %vm532, %v133
  %647 = vst.msk [vmem:[%s3 + $0x72] sm:$0x1] %vm532, %v134
  %648 = vst.msk [vmem:[%s3 + $0x73] sm:$0x1] %vm532, %v135
  %649 = vst.msk [vmem:[%s3 + $0x74] sm:$0x1] %vm532, %v136
  %650 = vst.msk [vmem:[%s3 + $0x75] sm:$0x1] %vm532, %v137
  %651 = vst.msk [vmem:[%s3 + $0x76] sm:$0x1] %vm532, %v138
  %652 = vst.msk [vmem:[%s3 + $0x77] sm:$0x1] %vm532, %v139
  %653 = vst.msk [vmem:[%s3 + $0x78] sm:$0x1] %vm532, %v140
  %654 = vst.msk [vmem:[%s3 + $0x79] sm:$0x1] %vm532, %v141
  %655 = vst.msk [vmem:[%s3 + $0x7a] sm:$0x1] %vm532, %v142
  %656 = vst.msk [vmem:[%s3 + $0x7b] sm:$0x1] %vm532, %v143
  %657 = vst.msk [vmem:[%s3 + $0x7c] sm:$0x1] %vm532, %v144
  %658 = vst.msk [vmem:[%s3 + $0x7d] sm:$0x1] %vm532, %v145
  %659 = vst.msk [vmem:[%s3 + $0x7e] sm:$0x1] %vm532, %v146
  %660 = vst.msk [vmem:[%s3 + $0x7f] sm:$0x1] %vm532, %v147
  %661 = vst.msk [vmem:[%s3 + $0x80] sm:$0x1] %vm532, %v148
  %662 = vst.msk [vmem:[%s3 + $0x81] sm:$0x1] %vm532, %v149
  %663 = vst.msk [vmem:[%s3 + $0x82] sm:$0x1] %vm532, %v150
  %664 = vst.msk [vmem:[%s3 + $0x83] sm:$0x1] %vm532, %v151
  %665 = vst.msk [vmem:[%s3 + $0x84] sm:$0x1] %vm532, %v152
  %666 = vst.msk [vmem:[%s3 + $0x85] sm:$0x1] %vm532, %v153
  %667 = vst.msk [vmem:[%s3 + $0x86] sm:$0x1] %vm532, %v154
  %668 = vst.msk [vmem:[%s3 + $0x87] sm:$0x1] %vm532, %v155
  %669 = vst.msk [vmem:[%s3 + $0x88] sm:$0x1] %vm532, %v156
  %670 = vst.msk [vmem:[%s3 + $0x89] sm:$0x1] %vm532, %v157
  %671 = vst.msk [vmem:[%s3 + $0x8a] sm:$0x1] %vm532, %v158
  %672 = vst.msk [vmem:[%s3 + $0x8b] sm:$0x1] %vm532, %v159
  %673 = vst.msk [vmem:[%s3 + $0x8c] sm:$0x1] %vm532, %v160
  %674 = vst.msk [vmem:[%s3 + $0x8d] sm:$0x1] %vm532, %v161
  %675 = vst.msk [vmem:[%s3 + $0x8e] sm:$0x1] %vm532, %v162
  %676 = vst.msk [vmem:[%s3 + $0x8f] sm:$0x1] %vm532, %v163
  %677 = vst.msk [vmem:[%s3 + $0x90] sm:$0x1] %vm532, %v164
  %678 = vst.msk [vmem:[%s3 + $0x91] sm:$0x1] %vm532, %v165
  %679 = vst.msk [vmem:[%s3 + $0x92] sm:$0x1] %vm532, %v166
  %680 = vst.msk [vmem:[%s3 + $0x93] sm:$0x1] %vm532, %v167
  %681 = vst.msk [vmem:[%s3 + $0x94] sm:$0x1] %vm532, %v168
  %682 = vst.msk [vmem:[%s3 + $0x95] sm:$0x1] %vm532, %v169
  %683 = vst.msk [vmem:[%s3 + $0x96] sm:$0x1] %vm532, %v170
  %684 = vst.msk [vmem:[%s3 + $0x97] sm:$0x1] %vm532, %v171
  %685 = vst.msk [vmem:[%s3 + $0x98] sm:$0x1] %vm532, %v172
  %686 = vst.msk [vmem:[%s3 + $0x99] sm:$0x1] %vm532, %v173
  %687 = vst.msk [vmem:[%s3 + $0x9a] sm:$0x1] %vm532, %v174
  %688 = vst.msk [vmem:[%s3 + $0x9b] sm:$0x1] %vm532, %v175
  %689 = vst.msk [vmem:[%s3 + $0x9c] sm:$0x1] %vm532, %v176
  %690 = vst.msk [vmem:[%s3 + $0x9d] sm:$0x1] %vm532, %v177
  %691 = vst.msk [vmem:[%s3 + $0x9e] sm:$0x1] %vm532, %v178
  %692 = vst.msk [vmem:[%s3 + $0x9f] sm:$0x1] %vm532, %v179
  %693 = vst.msk [vmem:[%s3 + $0xa0] sm:$0x1] %vm532, %v180
  %694 = vst.msk [vmem:[%s3 + $0xa1] sm:$0x1] %vm532, %v181
  %695 = vst.msk [vmem:[%s3 + $0xa2] sm:$0x1] %vm532, %v182
  %696 = vst.msk [vmem:[%s3 + $0xa3] sm:$0x1] %vm532, %v183
  %697 = vst.msk [vmem:[%s3 + $0xa4] sm:$0x1] %vm532, %v184
  %698 = vst.msk [vmem:[%s3 + $0xa5] sm:$0x1] %vm532, %v185
  %699 = vst.msk [vmem:[%s3 + $0xa6] sm:$0x1] %vm532, %v186
  %700 = vst.msk [vmem:[%s3 + $0xa7] sm:$0x1] %vm532, %v187
  %701 = vst.msk [vmem:[%s3 + $0xa8] sm:$0x1] %vm532, %v188
  %702 = vst.msk [vmem:[%s3 + $0xa9] sm:$0x1] %vm532, %v189
  %703 = vst.msk [vmem:[%s3 + $0xaa] sm:$0x1] %vm532, %v190
  %704 = vst.msk [vmem:[%s3 + $0xab] sm:$0x1] %vm532, %v191
  %705 = vst.msk [vmem:[%s3 + $0xac] sm:$0x1] %vm532, %v192
  %706 = vst.msk [vmem:[%s3 + $0xad] sm:$0x1] %vm532, %v193
  %707 = vst.msk [vmem:[%s3 + $0xae] sm:$0x1] %vm532, %v194
  %708 = vst.msk [vmem:[%s3 + $0xaf] sm:$0x1] %vm532, %v195
  %709 = vst.msk [vmem:[%s3 + $0xb0] sm:$0x1] %vm532, %v196
  %710 = vst.msk [vmem:[%s3 + $0xb1] sm:$0x1] %vm532, %v197
  %711 = vst.msk [vmem:[%s3 + $0xb2] sm:$0x1] %vm532, %v198
  %712 = vst.msk [vmem:[%s3 + $0xb3] sm:$0x1] %vm532, %v199
  %713 = vst.msk [vmem:[%s3 + $0xb4] sm:$0x1] %vm532, %v200
  %714 = vst.msk [vmem:[%s3 + $0xb5] sm:$0x1] %vm532, %v201
  %715 = vst.msk [vmem:[%s3 + $0xb6] sm:$0x1] %vm532, %v202
  %716 = vst.msk [vmem:[%s3 + $0xb7] sm:$0x1] %vm532, %v203
  %717 = vst.msk [vmem:[%s3 + $0xb8] sm:$0x1] %vm532, %v204
  %718 = vst.msk [vmem:[%s3 + $0xb9] sm:$0x1] %vm532, %v205
  %719 = vst.msk [vmem:[%s3 + $0xba] sm:$0x1] %vm532, %v206
  %720 = vst.msk [vmem:[%s3 + $0xbb] sm:$0x1] %vm532, %v207
  %721 = vst.msk [vmem:[%s3 + $0xbc] sm:$0x1] %vm532, %v208
  %722 = vst.msk [vmem:[%s3 + $0xbd] sm:$0x1] %vm532, %v209
  %723 = vst.msk [vmem:[%s3 + $0xbe] sm:$0x1] %vm532, %v210
  %724 = vst.msk [vmem:[%s3 + $0xbf] sm:$0x1] %vm532, %v211
  %725 = vst.msk [vmem:[%s3 + $0xc0] sm:$0x1] %vm532, %v212
  %726 = vst.msk [vmem:[%s3 + $0xc1] sm:$0x1] %vm532, %v213
  %727 = vst.msk [vmem:[%s3 + $0xc2] sm:$0x1] %vm532, %v214
  %728 = vst.msk [vmem:[%s3 + $0xc3] sm:$0x1] %vm532, %v215
  %729 = vst.msk [vmem:[%s3 + $0xc4] sm:$0x1] %vm532, %v216
  %730 = vst.msk [vmem:[%s3 + $0xc5] sm:$0x1] %vm532, %v217
  %731 = vst.msk [vmem:[%s3 + $0xc6] sm:$0x1] %vm532, %v218
  %732 = vst.msk [vmem:[%s3 + $0xc7] sm:$0x1] %vm532, %v219
  %733 = vst.msk [vmem:[%s3 + $0xc8] sm:$0x1] %vm532, %v220
  %734 = vst.msk [vmem:[%s3 + $0xc9] sm:$0x1] %vm532, %v221
  %735 = vst.msk [vmem:[%s3 + $0xca] sm:$0x1] %vm532, %v222
  %736 = vst.msk [vmem:[%s3 + $0xcb] sm:$0x1] %vm532, %v223
  %737 = vst.msk [vmem:[%s3 + $0xcc] sm:$0x1] %vm532, %v224
  %738 = vst.msk [vmem:[%s3 + $0xcd] sm:$0x1] %vm532, %v225
  %739 = vst.msk [vmem:[%s3 + $0xce] sm:$0x1] %vm532, %v226
  %740 = vst.msk [vmem:[%s3 + $0xcf] sm:$0x1] %vm532, %v227
  %741 = vst.msk [vmem:[%s3 + $0xd0] sm:$0x1] %vm532, %v228
  %742 = vst.msk [vmem:[%s3 + $0xd1] sm:$0x1] %vm532, %v229
  %743 = vst.msk [vmem:[%s3 + $0xd2] sm:$0x1] %vm532, %v230
  %744 = vst.msk [vmem:[%s3 + $0xd3] sm:$0x1] %vm532, %v231
  %745 = vst.msk [vmem:[%s3 + $0xd4] sm:$0x1] %vm532, %v232
  %746 = vst.msk [vmem:[%s3 + $0xd5] sm:$0x1] %vm532, %v233
  %747 = vst.msk [vmem:[%s3 + $0xd6] sm:$0x1] %vm532, %v234
  %748 = vst.msk [vmem:[%s3 + $0xd7] sm:$0x1] %vm532, %v235
  %749 = vst.msk [vmem:[%s3 + $0xd8] sm:$0x1] %vm532, %v236
  %750 = vst.msk [vmem:[%s3 + $0xd9] sm:$0x1] %vm532, %v237
  %751 = vst.msk [vmem:[%s3 + $0xda] sm:$0x1] %vm532, %v238
  %752 = vst.msk [vmem:[%s3 + $0xdb] sm:$0x1] %vm532, %v239
  %753 = vst.msk [vmem:[%s3 + $0xdc] sm:$0x1] %vm532, %v240
  %754 = vst.msk [vmem:[%s3 + $0xdd] sm:$0x1] %vm532, %v241
  %755 = vst.msk [vmem:[%s3 + $0xde] sm:$0x1] %vm532, %v242
  %756 = vst.msk [vmem:[%s3 + $0xdf] sm:$0x1] %vm532, %v243
  %757 = vst.msk [vmem:[%s3 + $0xe0] sm:$0x1] %vm532, %v244
  %758 = vst.msk [vmem:[%s3 + $0xe1] sm:$0x1] %vm532, %v245
  %759 = vst.msk [vmem:[%s3 + $0xe2] sm:$0x1] %vm532, %v246
  %760 = vst.msk [vmem:[%s3 + $0xe3] sm:$0x1] %vm532, %v247
  %761 = vst.msk [vmem:[%s3 + $0xe4] sm:$0x1] %vm532, %v248
  %762 = vst.msk [vmem:[%s3 + $0xe5] sm:$0x1] %vm532, %v249
  %763 = vst.msk [vmem:[%s3 + $0xe6] sm:$0x1] %vm532, %v250
  %764 = vst.msk [vmem:[%s3 + $0xe7] sm:$0x1] %vm532, %v251
  %765 = vst.msk [vmem:[%s3 + $0xe8] sm:$0x1] %vm532, %v252
  %766 = vst.msk [vmem:[%s3 + $0xe9] sm:$0x1] %vm532, %v253
  %767 = vst.msk [vmem:[%s3 + $0xea] sm:$0x1] %vm532, %v254
  %768 = vst.msk [vmem:[%s3 + $0xeb] sm:$0x1] %vm532, %v255
  %769 = vst.msk [vmem:[%s3 + $0xec] sm:$0x1] %vm532, %v256
  %770 = vst.msk [vmem:[%s3 + $0xed] sm:$0x1] %vm532, %v257
  %771 = vst.msk [vmem:[%s3 + $0xee] sm:$0x1] %vm532, %v258
  %772 = vst.msk [vmem:[%s3 + $0xef] sm:$0x1] %vm532, %v259
  %773 = vst.msk [vmem:[%s3 + $0xf0] sm:$0x1] %vm532, %v260
  %774 = vst.msk [vmem:[%s3 + $0xf1] sm:$0x1] %vm532, %v261
  %775 = vst.msk [vmem:[%s3 + $0xf2] sm:$0x1] %vm532, %v262
  %776 = vst.msk [vmem:[%s3 + $0xf3] sm:$0x1] %vm532, %v263
  %777 = vst.msk [vmem:[%s3 + $0xf4] sm:$0x1] %vm532, %v264
  %778 = vst.msk [vmem:[%s3 + $0xf5] sm:$0x1] %vm532, %v265
  %779 = vst.msk [vmem:[%s3 + $0xf6] sm:$0x1] %vm532, %v266
  %780 = vst.msk [vmem:[%s3 + $0xf7] sm:$0x1] %vm532, %v267
  %781 = vst.msk [vmem:[%s3 + $0xf8] sm:$0x1] %vm532, %v268
  %782 = vst.msk [vmem:[%s3 + $0xf9] sm:$0x1] %vm532, %v269
  %783 = vst.msk [vmem:[%s3 + $0xfa] sm:$0x1] %vm532, %v270
  %784 = vst.msk [vmem:[%s3 + $0xfb] sm:$0x1] %vm532, %v271
  %785 = vst.msk [vmem:[%s3 + $0xfc] sm:$0x1] %vm532, %v272
  %786 = vst.msk [vmem:[%s3 + $0xfd] sm:$0x1] %vm532, %v273
  %787 = vst.msk [vmem:[%s3 + $0xfe] sm:$0x1] %vm532, %v274
  %788 = vst.msk [vmem:[%s3 + $0xff] sm:$0x1] %vm532, %v275
  %789 = vst.msk [vmem:[%s3 + $0x100] sm:$0x1] %vm532, %v276
  %790 = vst.msk [vmem:[%s3 + $0x101] sm:$0x1] %vm532, %v277
  %791 = vst.msk [vmem:[%s3 + $0x102] sm:$0x1] %vm532, %v278
  %792 = vst.msk [vmem:[%s3 + $0x103] sm:$0x1] %vm532, %v279
  %793 = vst.msk [vmem:[%s3 + $0x104] sm:$0x1] %vm532, %v280
  %794 = vst.msk [vmem:[%s3 + $0x105] sm:$0x1] %vm532, %v281
  %795 = vst.msk [vmem:[%s3 + $0x106] sm:$0x1] %vm532, %v282
  %796 = vst.msk [vmem:[%s3 + $0x107] sm:$0x1] %vm532, %v283
  %797 = vst.msk [vmem:[%s3 + $0x108] sm:$0x1] %vm532, %v284
  %798 = vst.msk [vmem:[%s3 + $0x109] sm:$0x1] %vm532, %v285
  %799 = vst.msk [vmem:[%s3 + $0x10a] sm:$0x1] %vm532, %v286
  %800 = vst.msk [vmem:[%s3 + $0x10b] sm:$0x1] %vm532, %v287
  %801 = vst.msk [vmem:[%s3 + $0x10c] sm:$0x1] %vm532, %v288
  %802 = vst.msk [vmem:[%s3 + $0x10d] sm:$0x1] %vm532, %v289
  %803 = vst.msk [vmem:[%s3 + $0x10e] sm:$0x1] %vm532, %v290
  %804 = vst.msk [vmem:[%s3 + $0x10f] sm:$0x1] %vm532, %v291
  %805 = vst.msk [vmem:[%s3 + $0x110] sm:$0x1] %vm532, %v292
  %806 = vst.msk [vmem:[%s3 + $0x111] sm:$0x1] %vm532, %v293
  %807 = vst.msk [vmem:[%s3 + $0x112] sm:$0x1] %vm532, %v294
  %808 = vst.msk [vmem:[%s3 + $0x113] sm:$0x1] %vm532, %v295
  %809 = vst.msk [vmem:[%s3 + $0x114] sm:$0x1] %vm532, %v296
  %810 = vst.msk [vmem:[%s3 + $0x115] sm:$0x1] %vm532, %v297
  %811 = vst.msk [vmem:[%s3 + $0x116] sm:$0x1] %vm532, %v298
  %812 = vst.msk [vmem:[%s3 + $0x117] sm:$0x1] %vm532, %v299
  %813 = vst.msk [vmem:[%s3 + $0x118] sm:$0x1] %vm532, %v300
  %814 = vst.msk [vmem:[%s3 + $0x119] sm:$0x1] %vm532, %v301
  %815 = vst.msk [vmem:[%s3 + $0x11a] sm:$0x1] %vm532, %v302
  %816 = vst.msk [vmem:[%s3 + $0x11b] sm:$0x1] %vm532, %v303
  %817 = vst.msk [vmem:[%s3 + $0x11c] sm:$0x1] %vm532, %v304
  %818 = vst.msk [vmem:[%s3 + $0x11d] sm:$0x1] %vm532, %v305
  %819 = vst.msk [vmem:[%s3 + $0x11e] sm:$0x1] %vm532, %v306
  %820 = vst.msk [vmem:[%s3 + $0x11f] sm:$0x1] %vm532, %v307
  %821 = vst.msk [vmem:[%s3 + $0x120] sm:$0x1] %vm532, %v308
  %822 = vst.msk [vmem:[%s3 + $0x121] sm:$0x1] %vm532, %v309
  %823 = vst.msk [vmem:[%s3 + $0x122] sm:$0x1] %vm532, %v310
  %824 = vst.msk [vmem:[%s3 + $0x123] sm:$0x1] %vm532, %v311
  %825 = vst.msk [vmem:[%s3 + $0x124] sm:$0x1] %vm532, %v312
  %826 = vst.msk [vmem:[%s3 + $0x125] sm:$0x1] %vm532, %v313
  %827 = vst.msk [vmem:[%s3 + $0x126] sm:$0x1] %vm532, %v314
  %828 = vst.msk [vmem:[%s3 + $0x127] sm:$0x1] %vm532, %v315
  %829 = vst.msk [vmem:[%s3 + $0x128] sm:$0x1] %vm532, %v316
  %830 = vst.msk [vmem:[%s3 + $0x129] sm:$0x1] %vm532, %v317
  %831 = vst.msk [vmem:[%s3 + $0x12a] sm:$0x1] %vm532, %v318
  %832 = vst.msk [vmem:[%s3 + $0x12b] sm:$0x1] %vm532, %v319
  %833 = vst.msk [vmem:[%s3 + $0x12c] sm:$0x1] %vm532, %v320
  %834 = vst.msk [vmem:[%s3 + $0x12d] sm:$0x1] %vm532, %v321
  %835 = vst.msk [vmem:[%s3 + $0x12e] sm:$0x1] %vm532, %v322
  %836 = vst.msk [vmem:[%s3 + $0x12f] sm:$0x1] %vm532, %v323
  %837 = vst.msk [vmem:[%s3 + $0x130] sm:$0x1] %vm532, %v324
  %838 = vst.msk [vmem:[%s3 + $0x131] sm:$0x1] %vm532, %v325
  %839 = vst.msk [vmem:[%s3 + $0x132] sm:$0x1] %vm532, %v326
  %840 = vst.msk [vmem:[%s3 + $0x133] sm:$0x1] %vm532, %v327
  %841 = vst.msk [vmem:[%s3 + $0x134] sm:$0x1] %vm532, %v328
  %842 = vst.msk [vmem:[%s3 + $0x135] sm:$0x1] %vm532, %v329
  %843 = vst.msk [vmem:[%s3 + $0x136] sm:$0x1] %vm532, %v330
  %844 = vst.msk [vmem:[%s3 + $0x137] sm:$0x1] %vm532, %v331
  %845 = vst.msk [vmem:[%s3 + $0x138] sm:$0x1] %vm532, %v332
  %846 = vst.msk [vmem:[%s3 + $0x139] sm:$0x1] %vm532, %v333
  %847 = vst.msk [vmem:[%s3 + $0x13a] sm:$0x1] %vm532, %v334
  %848 = vst.msk [vmem:[%s3 + $0x13b] sm:$0x1] %vm532, %v335
  %849 = vst.msk [vmem:[%s3 + $0x13c] sm:$0x1] %vm532, %v336
  %850 = vst.msk [vmem:[%s3 + $0x13d] sm:$0x1] %vm532, %v337
  %851 = vst.msk [vmem:[%s3 + $0x13e] sm:$0x1] %vm532, %v338
  %852 = vst.msk [vmem:[%s3 + $0x13f] sm:$0x1] %vm532, %v339
  %853 = vst.msk [vmem:[%s3 + $0x140] sm:$0x1] %vm532, %v340
  %854 = vst.msk [vmem:[%s3 + $0x141] sm:$0x1] %vm532, %v341
  %855 = vst.msk [vmem:[%s3 + $0x142] sm:$0x1] %vm532, %v342
  %856 = vst.msk [vmem:[%s3 + $0x143] sm:$0x1] %vm532, %v343
  %857 = vst.msk [vmem:[%s3 + $0x144] sm:$0x1] %vm532, %v344
  %858 = vst.msk [vmem:[%s3 + $0x145] sm:$0x1] %vm532, %v345
  %859 = vst.msk [vmem:[%s3 + $0x146] sm:$0x1] %vm532, %v346
  %860 = vst.msk [vmem:[%s3 + $0x147] sm:$0x1] %vm532, %v347
  %861 = vst.msk [vmem:[%s3 + $0x148] sm:$0x1] %vm532, %v348
  %862 = vst.msk [vmem:[%s3 + $0x149] sm:$0x1] %vm532, %v349
  %863 = vst.msk [vmem:[%s3 + $0x14a] sm:$0x1] %vm532, %v350
  %864 = vst.msk [vmem:[%s3 + $0x14b] sm:$0x1] %vm532, %v351
  %865 = vst.msk [vmem:[%s3 + $0x14c] sm:$0x1] %vm532, %v352
  %866 = vst.msk [vmem:[%s3 + $0x14d] sm:$0x1] %vm532, %v353
  %867 = vst.msk [vmem:[%s3 + $0x14e] sm:$0x1] %vm532, %v354
  %868 = vst.msk [vmem:[%s3 + $0x14f] sm:$0x1] %vm532, %v355
  %869 = vst.msk [vmem:[%s3 + $0x150] sm:$0x1] %vm532, %v356
  %870 = vst.msk [vmem:[%s3 + $0x151] sm:$0x1] %vm532, %v357
  %871 = vst.msk [vmem:[%s3 + $0x152] sm:$0x1] %vm532, %v358
  %872 = vst.msk [vmem:[%s3 + $0x153] sm:$0x1] %vm532, %v359
  %873 = vst.msk [vmem:[%s3 + $0x154] sm:$0x1] %vm532, %v360
  %874 = vst.msk [vmem:[%s3 + $0x155] sm:$0x1] %vm532, %v361
  %875 = vst.msk [vmem:[%s3 + $0x156] sm:$0x1] %vm532, %v362
  %876 = vst.msk [vmem:[%s3 + $0x157] sm:$0x1] %vm532, %v363
  %877 = vst.msk [vmem:[%s3 + $0x158] sm:$0x1] %vm532, %v364
  %878 = vst.msk [vmem:[%s3 + $0x159] sm:$0x1] %vm532, %v365
  %879 = vst.msk [vmem:[%s3 + $0x15a] sm:$0x1] %vm532, %v366
  %880 = vst.msk [vmem:[%s3 + $0x15b] sm:$0x1] %vm532, %v367
  %881 = vst.msk [vmem:[%s3 + $0x15c] sm:$0x1] %vm532, %v368
  %882 = vst.msk [vmem:[%s3 + $0x15d] sm:$0x1] %vm532, %v369
  %883 = vst.msk [vmem:[%s3 + $0x15e] sm:$0x1] %vm532, %v370
  %884 = vst.msk [vmem:[%s3 + $0x15f] sm:$0x1] %vm532, %v371
  %885 = vst.msk [vmem:[%s3 + $0x160] sm:$0x1] %vm532, %v372
  %886 = vst.msk [vmem:[%s3 + $0x161] sm:$0x1] %vm532, %v373
  %887 = vst.msk [vmem:[%s3 + $0x162] sm:$0x1] %vm532, %v374
  %888 = vst.msk [vmem:[%s3 + $0x163] sm:$0x1] %vm532, %v375
  %889 = vst.msk [vmem:[%s3 + $0x164] sm:$0x1] %vm532, %v376
  %890 = vst.msk [vmem:[%s3 + $0x165] sm:$0x1] %vm532, %v377
  %891 = vst.msk [vmem:[%s3 + $0x166] sm:$0x1] %vm532, %v378
  %892 = vst.msk [vmem:[%s3 + $0x167] sm:$0x1] %vm532, %v379
  %893 = vst.msk [vmem:[%s3 + $0x168] sm:$0x1] %vm532, %v380
  %894 = vst.msk [vmem:[%s3 + $0x169] sm:$0x1] %vm532, %v381
  %895 = vst.msk [vmem:[%s3 + $0x16a] sm:$0x1] %vm532, %v382
  %896 = vst.msk [vmem:[%s3 + $0x16b] sm:$0x1] %vm532, %v383
  %897 = vst.msk [vmem:[%s3 + $0x16c] sm:$0x1] %vm532, %v384
  %898 = vst.msk [vmem:[%s3 + $0x16d] sm:$0x1] %vm532, %v385
  %899 = vst.msk [vmem:[%s3 + $0x16e] sm:$0x1] %vm532, %v386
  %900 = vst.msk [vmem:[%s3 + $0x16f] sm:$0x1] %vm532, %v387
  %901 = vst.msk [vmem:[%s3 + $0x170] sm:$0x1] %vm532, %v388
  %902 = vst.msk [vmem:[%s3 + $0x171] sm:$0x1] %vm532, %v389
  %903 = vst.msk [vmem:[%s3 + $0x172] sm:$0x1] %vm532, %v390
  %904 = vst.msk [vmem:[%s3 + $0x173] sm:$0x1] %vm532, %v391
  %905 = vst.msk [vmem:[%s3 + $0x174] sm:$0x1] %vm532, %v392
  %906 = vst.msk [vmem:[%s3 + $0x175] sm:$0x1] %vm532, %v393
  %907 = vst.msk [vmem:[%s3 + $0x176] sm:$0x1] %vm532, %v394
  %908 = vst.msk [vmem:[%s3 + $0x177] sm:$0x1] %vm532, %v395
  %909 = vst.msk [vmem:[%s3 + $0x178] sm:$0x1] %vm532, %v396
  %910 = vst.msk [vmem:[%s3 + $0x179] sm:$0x1] %vm532, %v397
  %911 = vst.msk [vmem:[%s3 + $0x17a] sm:$0x1] %vm532, %v398
  %912 = vst.msk [vmem:[%s3 + $0x17b] sm:$0x1] %vm532, %v399
  %913 = vst.msk [vmem:[%s3 + $0x17c] sm:$0x1] %vm532, %v400
  %914 = vst.msk [vmem:[%s3 + $0x17d] sm:$0x1] %vm532, %v401
  %915 = vst.msk [vmem:[%s3 + $0x17e] sm:$0x1] %vm532, %v402
  %916 = vst.msk [vmem:[%s3 + $0x17f] sm:$0x1] %vm532, %v403
  %917 = vst.msk [vmem:[%s3 + $0x180] sm:$0x1] %vm532, %v404
  %918 = vst.msk [vmem:[%s3 + $0x181] sm:$0x1] %vm532, %v405
  %919 = vst.msk [vmem:[%s3 + $0x182] sm:$0x1] %vm532, %v406
  %920 = vst.msk [vmem:[%s3 + $0x183] sm:$0x1] %vm532, %v407
  %921 = vst.msk [vmem:[%s3 + $0x184] sm:$0x1] %vm532, %v408
  %922 = vst.msk [vmem:[%s3 + $0x185] sm:$0x1] %vm532, %v409
  %923 = vst.msk [vmem:[%s3 + $0x186] sm:$0x1] %vm532, %v410
  %924 = vst.msk [vmem:[%s3 + $0x187] sm:$0x1] %vm532, %v411
  %925 = vst.msk [vmem:[%s3 + $0x188] sm:$0x1] %vm532, %v412
  %926 = vst.msk [vmem:[%s3 + $0x189] sm:$0x1] %vm532, %v413
  %927 = vst.msk [vmem:[%s3 + $0x18a] sm:$0x1] %vm532, %v414
  %928 = vst.msk [vmem:[%s3 + $0x18b] sm:$0x1] %vm532, %v415
  %929 = vst.msk [vmem:[%s3 + $0x18c] sm:$0x1] %vm532, %v416
  %930 = vst.msk [vmem:[%s3 + $0x18d] sm:$0x1] %vm532, %v417
  %931 = vst.msk [vmem:[%s3 + $0x18e] sm:$0x1] %vm532, %v418
  %932 = vst.msk [vmem:[%s3 + $0x18f] sm:$0x1] %vm532, %v419
  %933 = vst.msk [vmem:[%s3 + $0x190] sm:$0x1] %vm532, %v420
  %934 = vst.msk [vmem:[%s3 + $0x191] sm:$0x1] %vm532, %v421
  %935 = vst.msk [vmem:[%s3 + $0x192] sm:$0x1] %vm532, %v422
  %936 = vst.msk [vmem:[%s3 + $0x193] sm:$0x1] %vm532, %v423
  %937 = vst.msk [vmem:[%s3 + $0x194] sm:$0x1] %vm532, %v424
  %938 = vst.msk [vmem:[%s3 + $0x195] sm:$0x1] %vm532, %v425
  %939 = vst.msk [vmem:[%s3 + $0x196] sm:$0x1] %vm532, %v426
  %940 = vst.msk [vmem:[%s3 + $0x197] sm:$0x1] %vm532, %v427
  %941 = vst.msk [vmem:[%s3 + $0x198] sm:$0x1] %vm532, %v428
  %942 = vst.msk [vmem:[%s3 + $0x199] sm:$0x1] %vm532, %v429
  %943 = vst.msk [vmem:[%s3 + $0x19a] sm:$0x1] %vm532, %v430
  %944 = vst.msk [vmem:[%s3 + $0x19b] sm:$0x1] %vm532, %v431
  %945 = vst.msk [vmem:[%s3 + $0x19c] sm:$0x1] %vm532, %v432
  %946 = vst.msk [vmem:[%s3 + $0x19d] sm:$0x1] %vm532, %v433
  %947 = vst.msk [vmem:[%s3 + $0x19e] sm:$0x1] %vm532, %v434
  %948 = vst.msk [vmem:[%s3 + $0x19f] sm:$0x1] %vm532, %v435
  %949 = vst.msk [vmem:[%s3 + $0x1a0] sm:$0x1] %vm532, %v436
  %950 = vst.msk [vmem:[%s3 + $0x1a1] sm:$0x1] %vm532, %v437
  %951 = vst.msk [vmem:[%s3 + $0x1a2] sm:$0x1] %vm532, %v438
  %952 = vst.msk [vmem:[%s3 + $0x1a3] sm:$0x1] %vm532, %v439
  %953 = vst.msk [vmem:[%s3 + $0x1a4] sm:$0x1] %vm532, %v440
  %954 = vst.msk [vmem:[%s3 + $0x1a5] sm:$0x1] %vm532, %v441
  %955 = vst.msk [vmem:[%s3 + $0x1a6] sm:$0x1] %vm532, %v442
  %956 = vst.msk [vmem:[%s3 + $0x1a7] sm:$0x1] %vm532, %v443
  %957 = vst.msk [vmem:[%s3 + $0x1a8] sm:$0x1] %vm532, %v444
  %958 = vst.msk [vmem:[%s3 + $0x1a9] sm:$0x1] %vm532, %v445
  %959 = vst.msk [vmem:[%s3 + $0x1aa] sm:$0x1] %vm532, %v446
  %960 = vst.msk [vmem:[%s3 + $0x1ab] sm:$0x1] %vm532, %v447
  %961 = vst.msk [vmem:[%s3 + $0x1ac] sm:$0x1] %vm532, %v448
  %962 = vst.msk [vmem:[%s3 + $0x1ad] sm:$0x1] %vm532, %v449
  %963 = vst.msk [vmem:[%s3 + $0x1ae] sm:$0x1] %vm532, %v450
  %964 = vst.msk [vmem:[%s3 + $0x1af] sm:$0x1] %vm532, %v451
  %965 = vst.msk [vmem:[%s3 + $0x1b0] sm:$0x1] %vm532, %v452
  %966 = vst.msk [vmem:[%s3 + $0x1b1] sm:$0x1] %vm532, %v453
  %967 = vst.msk [vmem:[%s3 + $0x1b2] sm:$0x1] %vm532, %v454
  %968 = vst.msk [vmem:[%s3 + $0x1b3] sm:$0x1] %vm532, %v455
  %969 = vst.msk [vmem:[%s3 + $0x1b4] sm:$0x1] %vm532, %v456
  %970 = vst.msk [vmem:[%s3 + $0x1b5] sm:$0x1] %vm532, %v457
  %971 = vst.msk [vmem:[%s3 + $0x1b6] sm:$0x1] %vm532, %v458
  %972 = vst.msk [vmem:[%s3 + $0x1b7] sm:$0x1] %vm532, %v459
  %973 = vst.msk [vmem:[%s3 + $0x1b8] sm:$0x1] %vm532, %v460
  %974 = vst.msk [vmem:[%s3 + $0x1b9] sm:$0x1] %vm532, %v461
  %975 = vst.msk [vmem:[%s3 + $0x1ba] sm:$0x1] %vm532, %v462
  %976 = vst.msk [vmem:[%s3 + $0x1bb] sm:$0x1] %vm532, %v463
  %977 = vst.msk [vmem:[%s3 + $0x1bc] sm:$0x1] %vm532, %v464
  %978 = vst.msk [vmem:[%s3 + $0x1bd] sm:$0x1] %vm532, %v465
  %979 = vst.msk [vmem:[%s3 + $0x1be] sm:$0x1] %vm532, %v466
  %980 = vst.msk [vmem:[%s3 + $0x1bf] sm:$0x1] %vm532, %v467
  %981 = vst.msk [vmem:[%s3 + $0x1c0] sm:$0x1] %vm532, %v468
  %982 = vst.msk [vmem:[%s3 + $0x1c1] sm:$0x1] %vm532, %v469
  %983 = vst.msk [vmem:[%s3 + $0x1c2] sm:$0x1] %vm532, %v470
  %984 = vst.msk [vmem:[%s3 + $0x1c3] sm:$0x1] %vm532, %v471
  %985 = vst.msk [vmem:[%s3 + $0x1c4] sm:$0x1] %vm532, %v472
  %986 = vst.msk [vmem:[%s3 + $0x1c5] sm:$0x1] %vm532, %v473
  %987 = vst.msk [vmem:[%s3 + $0x1c6] sm:$0x1] %vm532, %v474
  %988 = vst.msk [vmem:[%s3 + $0x1c7] sm:$0x1] %vm532, %v475
  %989 = vst.msk [vmem:[%s3 + $0x1c8] sm:$0x1] %vm532, %v476
  %990 = vst.msk [vmem:[%s3 + $0x1c9] sm:$0x1] %vm532, %v477
  %991 = vst.msk [vmem:[%s3 + $0x1ca] sm:$0x1] %vm532, %v478
  %992 = vst.msk [vmem:[%s3 + $0x1cb] sm:$0x1] %vm532, %v479
  %993 = vst.msk [vmem:[%s3 + $0x1cc] sm:$0x1] %vm532, %v480
  %994 = vst.msk [vmem:[%s3 + $0x1cd] sm:$0x1] %vm532, %v481
  %995 = vst.msk [vmem:[%s3 + $0x1ce] sm:$0x1] %vm532, %v482
  %996 = vst.msk [vmem:[%s3 + $0x1cf] sm:$0x1] %vm532, %v483
  %997 = vst.msk [vmem:[%s3 + $0x1d0] sm:$0x1] %vm532, %v484
  %998 = vst.msk [vmem:[%s3 + $0x1d1] sm:$0x1] %vm532, %v485
  %999 = vst.msk [vmem:[%s3 + $0x1d2] sm:$0x1] %vm532, %v486
  %1000 = vst.msk [vmem:[%s3 + $0x1d3] sm:$0x1] %vm532, %v487
  %1001 = vst.msk [vmem:[%s3 + $0x1d4] sm:$0x1] %vm532, %v488
  %1002 = vst.msk [vmem:[%s3 + $0x1d5] sm:$0x1] %vm532, %v489
  %1003 = vst.msk [vmem:[%s3 + $0x1d6] sm:$0x1] %vm532, %v490
  %1004 = vst.msk [vmem:[%s3 + $0x1d7] sm:$0x1] %vm532, %v491
  %1005 = vst.msk [vmem:[%s3 + $0x1d8] sm:$0x1] %vm532, %v492
  %1006 = vst.msk [vmem:[%s3 + $0x1d9] sm:$0x1] %vm532, %v493
  %1007 = vst.msk [vmem:[%s3 + $0x1da] sm:$0x1] %vm532, %v494
  %1008 = vst.msk [vmem:[%s3 + $0x1db] sm:$0x1] %vm532, %v495
  %1009 = vst.msk [vmem:[%s3 + $0x1dc] sm:$0x1] %vm532, %v496
  %1010 = vst.msk [vmem:[%s3 + $0x1dd] sm:$0x1] %vm532, %v497
  %1011 = vst.msk [vmem:[%s3 + $0x1de] sm:$0x1] %vm532, %v498
  %1012 = vst.msk [vmem:[%s3 + $0x1df] sm:$0x1] %vm532, %v499
  %1013 = vst.msk [vmem:[%s3 + $0x1e0] sm:$0x1] %vm532, %v500
  %1014 = vst.msk [vmem:[%s3 + $0x1e1] sm:$0x1] %vm532, %v501
  %1015 = vst.msk [vmem:[%s3 + $0x1e2] sm:$0x1] %vm532, %v502
  %1016 = vst.msk [vmem:[%s3 + $0x1e3] sm:$0x1] %vm532, %v503
  %1017 = vst.msk [vmem:[%s3 + $0x1e4] sm:$0x1] %vm532, %v504
  %1018 = vst.msk [vmem:[%s3 + $0x1e5] sm:$0x1] %vm532, %v505
  %1019 = vst.msk [vmem:[%s3 + $0x1e6] sm:$0x1] %vm532, %v506
  %1020 = vst.msk [vmem:[%s3 + $0x1e7] sm:$0x1] %vm532, %v507
  %1021 = vst.msk [vmem:[%s3 + $0x1e8] sm:$0x1] %vm532, %v508
  %1022 = vst.msk [vmem:[%s3 + $0x1e9] sm:$0x1] %vm532, %v509
  %1023 = vst.msk [vmem:[%s3 + $0x1ea] sm:$0x1] %vm532, %v510
  %1024 = vst.msk [vmem:[%s3 + $0x1eb] sm:$0x1] %vm532, %v511
  %1025 = vst.msk [vmem:[%s3 + $0x1ec] sm:$0x1] %vm532, %v512
  %1026 = vst.msk [vmem:[%s3 + $0x1ed] sm:$0x1] %vm532, %v513
  %1027 = vst.msk [vmem:[%s3 + $0x1ee] sm:$0x1] %vm532, %v514
  %1028 = vst.msk [vmem:[%s3 + $0x1ef] sm:$0x1] %vm532, %v515
  %1029 = vst.msk [vmem:[%s3 + $0x1f0] sm:$0x1] %vm532, %v516
  %1030 = vst.msk [vmem:[%s3 + $0x1f1] sm:$0x1] %vm532, %v517
  %1031 = vst.msk [vmem:[%s3 + $0x1f2] sm:$0x1] %vm532, %v518
  %1032 = vst.msk [vmem:[%s3 + $0x1f3] sm:$0x1] %vm532, %v519
  %1033 = vst.msk [vmem:[%s3 + $0x1f4] sm:$0x1] %vm532, %v520
  %1034 = vst.msk [vmem:[%s3 + $0x1f5] sm:$0x1] %vm532, %v521
  %1035 = vst.msk [vmem:[%s3 + $0x1f6] sm:$0x1] %vm532, %v522
  %1036 = vst.msk [vmem:[%s3 + $0x1f7] sm:$0x1] %vm532, %v523
  %1037 = vst.msk [vmem:[%s3 + $0x1f8] sm:$0x1] %vm532, %v524
  %1038 = vst.msk [vmem:[%s3 + $0x1f9] sm:$0x1] %vm532, %v525
  %1039 = vst.msk [vmem:[%s3 + $0x1fa] sm:$0x1] %vm532, %v526
  %1040 = vst.msk [vmem:[%s3 + $0x1fb] sm:$0x1] %vm532, %v527
  %1041 = vst.msk [vmem:[%s3 + $0x1fc] sm:$0x1] %vm532, %v528
  %1042 = vst.msk [vmem:[%s3 + $0x1fd] sm:$0x1] %vm532, %v529
  %1043 = vst.msk [vmem:[%s3 + $0x1fe] sm:$0x1] %vm532, %v530
  %1044 = vst.msk [vmem:[%s3 + $0x1ff] sm:$0x1] %vm532, %v531
  loop: start=0, step=1, limit=8
  $region10: #{tpu_custom_call.1} parent=0 // loop_pre_header
    _
  $region11: #{tpu_custom_call.1} parent=0 // loop_header
    %s1046 = sphi 0, %s1050
    %p1047 = scmp.ge.s32.totalorder %s1046, 8
  $region12: #{tpu_custom_call.1} parent=0 // loop_header_branch
    %1049 = sbr.rel (%p1047) target = $region16
  $region13: #{tpu_custom_call.1} parent=0 // loop_body
    %s1051 = scalar_lea.vmem %s1, %s1046
    %v1052 = vld [vmem:[%s1051] sm:$0x1]
    %s1053 = sld [smem:[#allocation3 + %s1046]]
    %s1054 = scalar_lea.vmem %s3, %s1053
    %1055 = vst.msk [vmem:[%s1054] sm:$0x1] %vm532, %v1052
  $region14: #{tpu_custom_call.1} parent=0 // loop_footer
    %s1050 = sadd.s32 1, %s1046
  $region15: #{tpu_custom_call.1} parent=0 // loop_footer_branch
    %1045 = sbr.rel target = $region11
  $region16: #{tpu_custom_call.1} parent=0 // loop_exit
    _
  // Predicated region
  $region17: #{tpu_custom_call.1} parent=0 // pred_check
    _
  $region18: #{tpu_custom_call.1} parent=0 // pred_check_branch
    %1057 = sbr.rel (0) target = $region20
  $region19: #{tpu_custom_call.1} parent=0 // pred_region
    _
  $region20: #{tpu_custom_call.1} parent=0 // pred_fallthru
    _
  // Predicated region
  $region21: #{tpu_custom_call.1} parent=0 // pred_check
    _
  $region22: #{tpu_custom_call.1} parent=0 // pred_check_branch
    %1059 = sbr.rel (0) target = $region24
  $region23: #{tpu_custom_call.1} parent=0 // pred_region
    _
  $region24: #{tpu_custom_call.1} parent=0 // pred_fallthru
    _

</llo_original>
